<compile_context>
chip_gen: v7x
topology: tpu7x:2x2x1
jax: 0.10.0
libtpu: 0.0.40
codegen_flags: <defaults>
</compile_context>

<pallas_src>
import functools

import jax
import jax.numpy as jnp
from jax.experimental import pallas as pl
from jax.experimental.pallas import tpu as pltpu

EPS = 1e-5
HALO = 8  # rows of halo appended to each L tile (6 needed for the +/-3 taps, 8 keeps sublane alignment)


def _round_up(v, m):
    return (v + m - 1) // m * m


def _cdiv(a, b):
    return (a + b - 1) // b


# ------------------- phase 1: folded 7-tap conv + per-sample BN stat accumulation -------------------
def _phase1_kernel(x_ref, halo_ref, w_ref, fused_ref, stats_ref, win_ref, *, tl, l_valid):
    # x_ref    : (1, TL, Cp)     bf16  main rows of this tile's input window
    # halo_ref : (1, 1, 8, Cp)   bf16  first 8 rows of the next tile (halo)
    # w_ref    : (7, Cp, Cp)     bf16  folded 7-tap weights (grid-invariant block)
    # fused_ref: (1, TL, Cp)     bf16  pre-BN activations for this tile
    # stats_ref: (1, 2, Cp)      f32   per-sample (sum, sum_sq), accumulated across the j axis
    # win_ref  : (TL+8, Cp)      bf16  VMEM scratch: main rows + halo rows
    j = pl.program_id(1)

    # assemble the haloed window in VMEM (cheap VMEM->VMEM moves vs. 7 matmul reads)
    win_ref[0:tl, :] = x_ref[0]
    win_ref[tl:tl + HALO, :] = halo_ref[0, 0]

    acc = jnp.dot(win_ref[0:tl, :], w_ref[0], preferred_element_type=jnp.float32)
    for t in range(1, 7):                       # static unroll over tap offsets -3..+3
        acc = acc + jnp.dot(win_ref[t:t + tl, :], w_ref[t],
                            preferred_element_type=jnp.float32)

    fused_ref[0] = acc.astype(fused_ref.dtype)

    # per-tile (sum, sum_sq) from the f32 accumulator, masking the L-alignment padding rows
    rows = j * tl + jax.lax.broadcasted_iota(jnp.int32, (tl, 1), 0)
    fm = jnp.where(rows < l_valid, acc, 0.0)
    tile_stats = jnp.concatenate(
        [jnp.sum(fm, axis=0, keepdims=True),
         jnp.sum(fm * fm, axis=0, keepdims=True)], axis=0)       # (2, Cp)

    @pl.when(j == 0)
    def _():
        stats_ref[0] = tile_stats

    @pl.when(j > 0)
    def _():
        stats_ref[0] = stats_ref[0] + tile_stats


# ------------------- phase 2: normalize + affine + ReLU, write NCL-transposed output -------------------
def _phase2_kernel(f_ref, scale_ref, shift_ref, o_ref):
    # f_ref: (1, TL, Cp) bf16 ; scale/shift: (1, Cp) f32 ; o_ref: (1, Cp, TL) f32
    y = f_ref[0].astype(jnp.float32) * scale_ref[...] + shift_ref[...]
    o_ref[0] = jnp.maximum(y, 0.0).T


@functools.partial(jax.jit, static_argnames=("tl_max",))
def multi_scale_block(x, params, *, tl_max=512):
    """x: (N, C, L) float32 (PyTorch NCL). Returns (N, C, L) float32."""
    w1, b1, w2, b2, w3, b3, wf, bf, gamma, beta = params
    N, C, L = x.shape

    Cp = _round_up(C, 128)                        # lane-dense channel dim
    # TL is either a multiple of 128 (lane-dense transposed output blocks) or the full padded L
    TL = min(_round_up(tl_max, 128), _round_up(L, 8))
    num_tiles = _cdiv(L, TL)
    Lt = num_tiles * TL

    # ---- fold 3 dilated k=3 convs + the 1x1 fuse into one (7, Cp, Cp) weight stack ----
    # W_eff[t][i, o] = sum over (branch d, tap k) with (k-1)*d == t-3 of w_d[o', i, k] * wf[o, bi*C+o']
    # Conv/fuse biases are dropped: training-mode BN's mean subtraction removes them exactly.
    w_eff = jnp.zeros((7, C, C), jnp.float32)
    for bi, (w_b, d) in enumerate(((w1, 1), (w2, 2), (w3, 3))):
        f_b = jnp.transpose(wf[:, bi * C:(bi + 1) * C, 0])        # (C_mid, C_out)
        for k in range(3):
            w_eff = w_eff.at[(k - 1) * d + 3].add(jnp.transpose(w_b[:, :, k]) @ f_b)
    w_eff_p = (jnp.zeros((7, Cp, Cp), jnp.float32).at[:, :C, :C].set(w_eff)
               ).astype(jnp.bfloat16)

    # ---- bf16, channel-padded, haloed activation slab (NLC) ----
    x_nlc = jnp.transpose(x, (0, 2, 1))                           # (N, L, C)
    slab = jnp.pad(x_nlc, ((0, 0), (3, Lt + HALO - 3 - L), (0, Cp - C))
                   ).astype(jnp.bfloat16)                         # (N, Lt+8, Cp)
    body = slab[:, :Lt, :]                                        # main blocks   (N, Lt, Cp)
    halo_rows = (jnp.arange(num_tiles)[:, None] + 1) * TL + jnp.arange(HALO)[None, :]
    halo = slab[:, halo_rows, :]                                  # tiny halo     (N, num_tiles, 8, Cp)

    vmem_limit = 32 * 1024 * 1024                                 # safe on v5e/v6e/v7x; raise for huge Cp
    cparams_p1 = pltpu.CompilerParams(
        dimension_semantics=("parallel", "arbitrary"),            # N = megacore axis, j carries stats accum
        vmem_limit_bytes=vmem_limit)

    fused, stats = pl.pallas_call(
        functools.partial(_phase1_kernel, tl=TL, l_valid=L),
        grid=(N, num_tiles),
        in_specs=[
            pl.BlockSpec((1, TL, Cp), lambda n, j: (n, j, 0)),
            pl.BlockSpec((1, 1, HALO, Cp), lambda n, j: (n, j, 0, 0)),
            pl.BlockSpec((7, Cp, Cp), lambda n, j: (0, 0, 0)),    # grid-invariant weights
        ],
        out_specs=(
            pl.BlockSpec((1, TL, Cp), lambda n, j: (n, j, 0)),
            pl.BlockSpec((1, 2, Cp), lambda n, j: (n, 0, 0)),     # revisited across j (accumulator)
        ),
        out_shape=(
            jax.ShapeDtypeStruct((N, Lt, Cp), jnp.bfloat16),
            jax.ShapeDtypeStruct((N, 2, Cp), jnp.float32),
        ),
        scratch_shapes=[pltpu.VMEM((TL + HALO, Cp), jnp.bfloat16)],
        compiler_params=cparams_p1,
    )(body, halo, w_eff_p)

    # ---- finalize biased training-mode BN stats on the tiny (N, 2, Cp) slab ----
    s = jnp.sum(stats, axis=0)                                    # (2, Cp)
    cnt = float(N * L)
    mean = s[0] / cnt
    var = jnp.maximum(s[1] / cnt - mean * mean, 0.0)
    inv = jax.lax.rsqrt(var + EPS)
    gamma_p = jnp.zeros((Cp,), jnp.float32).at[:C].set(gamma)
    beta_p = jnp.zeros((Cp,), jnp.float32).at[:C].set(beta)
    scale = (gamma_p * inv)[None, :]                              # (1, Cp)
    shift = (beta_p - mean * gamma_p * inv)[None, :]              # (1, Cp)

    out_t = pl.pallas_call(
        _phase2_kernel,
        grid=(N, num_tiles),
        in_specs=[
            pl.BlockSpec((1, TL, Cp), lambda n, j: (n, j, 0)),
            pl.BlockSpec((1, Cp), lambda n, j: (0, 0)),
            pl.BlockSpec((1, Cp), lambda n, j: (0, 0)),
        ],
        out_specs=pl.BlockSpec((1, Cp, TL), lambda n, j: (n, 0, j)),   # NCL output, transpose fused in
        out_shape=jax.ShapeDtypeStruct((N, Cp, Lt), jnp.float32),
        compiler_params=pltpu.CompilerParams(
            dimension_semantics=("parallel", "parallel"),
            vmem_limit_bytes=vmem_limit),
    )(fused, scale, shift)

    return out_t[:, :C, :L]                                       # crop padding; no extra transpose pass


# ------------------------- pure-JAX reference (for validation) -------------------------
def reference(x, params):
    w1, b1, w2, b2, w3, b3, wf, bf, gamma, beta = params

    def conv1d(xx, w, b, d):
        y = jax.lax.conv_general_dilated(
            xx, w, window_strides=(1,), padding=[(d, d)], rhs_dilation=(d,),
            dimension_numbers=("NCH", "OIH", "NCH"))
        return y + b[None, :, None]

    x1 = conv1d(x, w1, b1, 1)
    x2 = conv1d(x, w2, b2, 2)
    x3 = conv1d(x, w3, b3, 3)
    cat = jnp.concatenate([x1, x2, x3], axis=1)
    fused = jax.lax.conv_general_dilated(
        cat, wf, window_strides=(1,), padding=[(0, 0)],
        dimension_numbers=("NCH", "OIH", "NCH")) + bf[None, :, None]
    mean = jnp.mean(fused, axis=(0, 2), keepdims=True)
    var = jnp.mean((fused - mean) ** 2, axis=(0, 2), keepdims=True)
    norm = (fused - mean) / jnp.sqrt(var + EPS)
    return jnp.maximum(norm * gamma[None, :, None] + beta[None, :, None], 0.0)


if __name__ == "__main__":
    N, C, L = 2, 4, 16
    key = jax.random.PRNGKey(0)
    ks = jax.random.split(key, 10)

    # deterministic synthetic parameters (PyTorch layouts)
    w1 = jax.random.normal(ks[0], (C, C, 3), jnp.float32) * 0.2
    b1 = jax.random.normal(ks[1], (C,), jnp.float32) * 0.1
    w2 = jax.random.normal(ks[2], (C, C, 3), jnp.float32) * 0.2
    b2 = jax.random.normal(ks[3], (C,), jnp.float32) * 0.1
    w3 = jax.random.normal(ks[4], (C, C, 3), jnp.float32) * 0.2
    b3 = jax.random.normal(ks[5], (C,), jnp.float32) * 0.1
    wf = jax.random.normal(ks[6], (C, 3 * C, 1), jnp.float32) * 0.2
    bf = jax.random.normal(ks[7], (C,), jnp.float32) * 0.1
    gamma = jnp.ones((C,), jnp.float32)    # BatchNorm1d default init
    beta = jnp.zeros((C,), jnp.float32)
    params = (w1, b1, w2, b2, w3, b3, wf, bf, gamma, beta)

    x = jax.random.normal(ks[8], (N, C, L), jnp.float32)

    out = jax.block_until_ready(multi_scale_block(x, params))
    ref = jax.block_until_ready(reference(x, params))

    assert out.shape == (N, C, L), out.shape
    err = float(jnp.max(jnp.abs(out - ref)))
    # tolerance relaxed vs f32-only version: MXU inputs and the fused intermediate are bf16
    assert err < 5e-2, err
    print("KERNEL_OK")
</pallas_src>

<mosaic_0001>
module attributes {stable_mosaic.version = 11 : i64} {
  func.func @_phase1_kernel(%arg0: i32, %arg1: i32, %arg2: memref<1x16x128xbf16, #tpu.memory_space<vmem>>, %arg3: memref<1x1x8x128xbf16, #tpu.memory_space<vmem>>, %arg4: memref<7x128x128xbf16, #tpu.memory_space<vmem>>, %arg5: memref<1x16x128xbf16, #tpu.memory_space<vmem>>, %arg6: memref<1x2x128xf32, #tpu.memory_space<vmem>>, %arg7: memref<24x128xbf16, #tpu.memory_space<vmem>>) attributes {dimension_semantics = [#tpu.dimension_semantics<parallel>, #tpu.dimension_semantics<arbitrary>], iteration_bounds = array<i64: 2, 1>, scalar_prefetch = 0 : i64, scratch_operands = 1 : i64, tpu.core_type = #tpu.core_type<tc>, window_params = [{transform_indices = @transform_0, window_bounds = array<i64: 1, 16, 128>}, {transform_indices = @transform_1, window_bounds = array<i64: 1, 1, 8, 128>}, {pipeline_mode = #tpu.pipeline_mode<synchronous>, transform_indices = @transform_2, window_bounds = array<i64: 7, 128, 128>}, {transform_indices = @transform_3, window_bounds = array<i64: 1, 16, 128>}, {transform_indices = @transform_4, window_bounds = array<i64: 1, 2, 128>}]} {
    %c0 = arith.constant 0 : index
    %c0_0 = arith.constant 0 : index
    %c0_1 = arith.constant 0 : index
    %0 = vector.load %arg2[%c0, %c0_0, %c0_1] : memref<1x16x128xbf16, #tpu.memory_space<vmem>>, vector<1x16x128xbf16>
    %1 = vector.shape_cast %0 : vector<1x16x128xbf16> to vector<16x128xbf16>
    %c0_2 = arith.constant 0 : index
    %c0_3 = arith.constant 0 : index
    %2 = vector.load %arg7[%c0_2, %c0_3] : memref<24x128xbf16, #tpu.memory_space<vmem>>, vector<16x128xbf16>
    tpu.vector_store %arg7[%c0_2, %c0_3], %1 {strides = array<i32>} : memref<24x128xbf16, #tpu.memory_space<vmem>>, vector<16x128xbf16>,
    %c0_4 = arith.constant 0 : index
    %c0_5 = arith.constant 0 : index
    %c0_6 = arith.constant 0 : index
    %c0_7 = arith.constant 0 : index
    %3 = vector.load %arg3[%c0_4, %c0_5, %c0_6, %c0_7] : memref<1x1x8x128xbf16, #tpu.memory_space<vmem>>, vector<1x1x8x128xbf16>
    %4 = vector.shape_cast %3 : vector<1x1x8x128xbf16> to vector<8x128xbf16>
    %c16 = arith.constant 16 : index
    %c0_8 = arith.constant 0 : index
    %5 = vector.load %arg7[%c16, %c0_8] : memref<24x128xbf16, #tpu.memory_space<vmem>>, vector<8x128xbf16>
    tpu.vector_store %arg7[%c16, %c0_8], %4 {strides = array<i32>} : memref<24x128xbf16, #tpu.memory_space<vmem>>, vector<8x128xbf16>,
    %c0_9 = arith.constant 0 : index
    %c0_10 = arith.constant 0 : index
    %6 = vector.load %arg7[%c0_9, %c0_10] : memref<24x128xbf16, #tpu.memory_space<vmem>>, vector<16x128xbf16>
    %c0_11 = arith.constant 0 : index
    %c0_12 = arith.constant 0 : index
    %c0_13 = arith.constant 0 : index
    %7 = vector.load %arg4[%c0_11, %c0_12, %c0_13] : memref<7x128x128xbf16, #tpu.memory_space<vmem>>, vector<1x128x128xbf16>
    %8 = vector.shape_cast %7 : vector<1x128x128xbf16> to vector<128x128xbf16>
    %cst = arith.constant dense<0.000000e+00> : vector<16x128xf32>
    %9 = tpu.matmul %6, %8, %cst {dimension_numbers = #tpu.dot_dimension_numbers<[1], [0], [0], [1], [0, 0, 1, 1], [], []>} : vector<16x128xbf16>, vector<128x128xbf16>, vector<16x128xf32> -> vector<16x128xf32>
    %c1 = arith.constant 1 : index
    %c0_14 = arith.constant 0 : index
    %10 = vector.load %arg7[%c1, %c0_14] : memref<24x128xbf16, #tpu.memory_space<vmem>>, vector<16x128xbf16>
    %c1_15 = arith.constant 1 : index
    %c0_16 = arith.constant 0 : index
    %c0_17 = arith.constant 0 : index
    %11 = vector.load %arg4[%c1_15, %c0_16, %c0_17] : memref<7x128x128xbf16, #tpu.memory_space<vmem>>, vector<1x128x128xbf16>
    %12 = vector.shape_cast %11 : vector<1x128x128xbf16> to vector<128x128xbf16>
    %cst_18 = arith.constant dense<0.000000e+00> : vector<16x128xf32>
    %13 = tpu.matmul %10, %12, %cst_18 {dimension_numbers = #tpu.dot_dimension_numbers<[1], [0], [0], [1], [0, 0, 1, 1], [], []>} : vector<16x128xbf16>, vector<128x128xbf16>, vector<16x128xf32> -> vector<16x128xf32>
    %14 = arith.addf %9, %13 : vector<16x128xf32>
    %c2 = arith.constant 2 : index
    %c0_19 = arith.constant 0 : index
    %15 = vector.load %arg7[%c2, %c0_19] : memref<24x128xbf16, #tpu.memory_space<vmem>>, vector<16x128xbf16>
    %c2_20 = arith.constant 2 : index
    %c0_21 = arith.constant 0 : index
    %c0_22 = arith.constant 0 : index
    %16 = vector.load %arg4[%c2_20, %c0_21, %c0_22] : memref<7x128x128xbf16, #tpu.memory_space<vmem>>, vector<1x128x128xbf16>
    %17 = vector.shape_cast %16 : vector<1x128x128xbf16> to vector<128x128xbf16>
    %cst_23 = arith.constant dense<0.000000e+00> : vector<16x128xf32>
    %18 = tpu.matmul %15, %17, %cst_23 {dimension_numbers = #tpu.dot_dimension_numbers<[1], [0], [0], [1], [0, 0, 1, 1], [], []>} : vector<16x128xbf16>, vector<128x128xbf16>, vector<16x128xf32> -> vector<16x128xf32>
    %19 = arith.addf %14, %18 : vector<16x128xf32>
    %c3 = arith.constant 3 : index
    %c0_24 = arith.constant 0 : index
    %20 = vector.load %arg7[%c3, %c0_24] : memref<24x128xbf16, #tpu.memory_space<vmem>>, vector<16x128xbf16>
    %c3_25 = arith.constant 3 : index
    %c0_26 = arith.constant 0 : index
    %c0_27 = arith.constant 0 : index
    %21 = vector.load %arg4[%c3_25, %c0_26, %c0_27] : memref<7x128x128xbf16, #tpu.memory_space<vmem>>, vector<1x128x128xbf16>
    %22 = vector.shape_cast %21 : vector<1x128x128xbf16> to vector<128x128xbf16>
    %cst_28 = arith.constant dense<0.000000e+00> : vector<16x128xf32>
    %23 = tpu.matmul %20, %22, %cst_28 {dimension_numbers = #tpu.dot_dimension_numbers<[1], [0], [0], [1], [0, 0, 1, 1], [], []>} : vector<16x128xbf16>, vector<128x128xbf16>, vector<16x128xf32> -> vector<16x128xf32>
    %24 = arith.addf %19, %23 : vector<16x128xf32>
    %c4 = arith.constant 4 : index
    %c0_29 = arith.constant 0 : index
    %25 = vector.load %arg7[%c4, %c0_29] : memref<24x128xbf16, #tpu.memory_space<vmem>>, vector<16x128xbf16>
    %c4_30 = arith.constant 4 : index
    %c0_31 = arith.constant 0 : index
    %c0_32 = arith.constant 0 : index
    %26 = vector.load %arg4[%c4_30, %c0_31, %c0_32] : memref<7x128x128xbf16, #tpu.memory_space<vmem>>, vector<1x128x128xbf16>
    %27 = vector.shape_cast %26 : vector<1x128x128xbf16> to vector<128x128xbf16>
    %cst_33 = arith.constant dense<0.000000e+00> : vector<16x128xf32>
    %28 = tpu.matmul %25, %27, %cst_33 {dimension_numbers = #tpu.dot_dimension_numbers<[1], [0], [0], [1], [0, 0, 1, 1], [], []>} : vector<16x128xbf16>, vector<128x128xbf16>, vector<16x128xf32> -> vector<16x128xf32>
    %29 = arith.addf %24, %28 : vector<16x128xf32>
    %c5 = arith.constant 5 : index
    %c0_34 = arith.constant 0 : index
    %30 = vector.load %arg7[%c5, %c0_34] : memref<24x128xbf16, #tpu.memory_space<vmem>>, vector<16x128xbf16>
    %c5_35 = arith.constant 5 : index
    %c0_36 = arith.constant 0 : index
    %c0_37 = arith.constant 0 : index
    %31 = vector.load %arg4[%c5_35, %c0_36, %c0_37] : memref<7x128x128xbf16, #tpu.memory_space<vmem>>, vector<1x128x128xbf16>
    %32 = vector.shape_cast %31 : vector<1x128x128xbf16> to vector<128x128xbf16>
    %cst_38 = arith.constant dense<0.000000e+00> : vector<16x128xf32>
    %33 = tpu.matmul %30, %32, %cst_38 {dimension_numbers = #tpu.dot_dimension_numbers<[1], [0], [0], [1], [0, 0, 1, 1], [], []>} : vector<16x128xbf16>, vector<128x128xbf16>, vector<16x128xf32> -> vector<16x128xf32>
    %34 = arith.addf %29, %33 : vector<16x128xf32>
    %c6 = arith.constant 6 : index
    %c0_39 = arith.constant 0 : index
    %35 = vector.load %arg7[%c6, %c0_39] : memref<24x128xbf16, #tpu.memory_space<vmem>>, vector<16x128xbf16>
    %c6_40 = arith.constant 6 : index
    %c0_41 = arith.constant 0 : index
    %c0_42 = arith.constant 0 : index
    %36 = vector.load %arg4[%c6_40, %c0_41, %c0_42] : memref<7x128x128xbf16, #tpu.memory_space<vmem>>, vector<1x128x128xbf16>
    %37 = vector.shape_cast %36 : vector<1x128x128xbf16> to vector<128x128xbf16>
    %cst_43 = arith.constant dense<0.000000e+00> : vector<16x128xf32>
    %38 = tpu.matmul %35, %37, %cst_43 {dimension_numbers = #tpu.dot_dimension_numbers<[1], [0], [0], [1], [0, 0, 1, 1], [], []>} : vector<16x128xbf16>, vector<128x128xbf16>, vector<16x128xf32> -> vector<16x128xf32>
    %39 = arith.addf %34, %38 : vector<16x128xf32>
    %40 = arith.truncf %39 : vector<16x128xf32> to vector<16x128xbf16>
    %c0_44 = arith.constant 0 : index
    %c0_45 = arith.constant 0 : index
    %c0_46 = arith.constant 0 : index
    %41 = vector.load %arg5[%c0_44, %c0_45, %c0_46] : memref<1x16x128xbf16, #tpu.memory_space<vmem>>, vector<1x16x128xbf16>
    %42 = vector.shape_cast %41 : vector<1x16x128xbf16> to vector<16x128xbf16>
    %43 = vector.shape_cast %40 : vector<16x128xbf16> to vector<1x16x128xbf16>
    tpu.vector_store %arg5[%c0_44, %c0_45, %c0_46], %43 {strides = array<i32>} : memref<1x16x128xbf16, #tpu.memory_space<vmem>>, vector<1x16x128xbf16>,
    %c16_i32 = arith.constant 16 : i32
    %44 = arith.muli %arg1, %c16_i32 : i32
    %45 = tpu.iota {dimensions = array<i32: 0>} : vector<16x1xi32>
    %46 = vector.broadcast %44 : i32 to vector<16x1xi32>
    %47 = arith.addi %46, %45 : vector<16x1xi32>
    %c16_i32_47 = arith.constant 16 : i32
    %48 = vector.broadcast %c16_i32_47 : i32 to vector<16x1xi32>
    %49 = arith.cmpi slt, %47, %48 : vector<16x1xi32>
    %cst_48 = arith.constant 0.000000e+00 : f32
    %50 = vector.shape_cast %49 : vector<16x1xi1> to vector<16x1xi1>
    %51 = vector.broadcast %50 : vector<16x1xi1> to vector<16x128xi1>
    %52 = vector.broadcast %cst_48 : f32 to vector<16x128xf32>
    %53 = arith.select %51, %39, %52 : vector<16x128xi1>, vector<16x128xf32>
    %cst_49 = arith.constant dense<0.000000e+00> : vector<128xf32>
    %54 = vector.multi_reduction <add>, %53, %cst_49 [0] : vector<16x128xf32> to vector<128xf32>
    %55 = vector.shape_cast %54 : vector<128xf32> to vector<1x128xf32>
    %56 = arith.mulf %53, %53 : vector<16x128xf32>
    %cst_50 = arith.constant dense<0.000000e+00> : vector<128xf32>
    %57 = vector.multi_reduction <add>, %56, %cst_50 [0] : vector<16x128xf32> to vector<128xf32>
    %58 = vector.shape_cast %57 : vector<128xf32> to vector<1x128xf32>
    %59 = tpu.concatenate %55, %58 in 0 : vector<1x128xf32>, vector<1x128xf32> -> vector<2x128xf32>
    %c0_i32 = arith.constant 0 : i32
    %60 = arith.cmpi eq, %arg1, %c0_i32 : i32
    %61 = arith.extui %60 : i1 to i32
    %c0_i32_51 = arith.constant 0 : i32
    %62 = arith.cmpi ne, %61, %c0_i32_51 : i32
    scf.if %62 {
      %c0_54 = arith.constant 0 : index
      %c0_55 = arith.constant 0 : index
      %c0_56 = arith.constant 0 : index
      %66 = vector.load %arg6[%c0_54, %c0_55, %c0_56] : memref<1x2x128xf32, #tpu.memory_space<vmem>>, vector<1x2x128xf32>
      %67 = vector.shape_cast %66 : vector<1x2x128xf32> to vector<2x128xf32>
      %68 = vector.shape_cast %59 : vector<2x128xf32> to vector<1x2x128xf32>
      tpu.vector_store %arg6[%c0_54, %c0_55, %c0_56], %68 {strides = array<i32>} : memref<1x2x128xf32, #tpu.memory_space<vmem>>, vector<1x2x128xf32>,
    } else {
    }
    %c0_i32_52 = arith.constant 0 : i32
    %63 = arith.cmpi sgt, %arg1, %c0_i32_52 : i32
    %64 = arith.extui %63 : i1 to i32
    %c0_i32_53 = arith.constant 0 : i32
    %65 = arith.cmpi ne, %64, %c0_i32_53 : i32
    scf.if %65 {
      %c0_54 = arith.constant 0 : index
      %c0_55 = arith.constant 0 : index
      %c0_56 = arith.constant 0 : index
      %66 = vector.load %arg6[%c0_54, %c0_55, %c0_56] : memref<1x2x128xf32, #tpu.memory_space<vmem>>, vector<1x2x128xf32>
      %67 = vector.shape_cast %66 : vector<1x2x128xf32> to vector<2x128xf32>
      %68 = arith.addf %67, %59 : vector<2x128xf32>
      %c0_57 = arith.constant 0 : index
      %c0_58 = arith.constant 0 : index
      %c0_59 = arith.constant 0 : index
      %69 = vector.load %arg6[%c0_57, %c0_58, %c0_59] : memref<1x2x128xf32, #tpu.memory_space<vmem>>, vector<1x2x128xf32>
      %70 = vector.shape_cast %69 : vector<1x2x128xf32> to vector<2x128xf32>
      %71 = vector.shape_cast %68 : vector<2x128xf32> to vector<1x2x128xf32>
      tpu.vector_store %arg6[%c0_57, %c0_58, %c0_59], %71 {strides = array<i32>} : memref<1x2x128xf32, #tpu.memory_space<vmem>>, vector<1x2x128xf32>,
    } else {
    }
    return
  }
  func.func @transform_0(%arg0: i32, %arg1: i32) -> (i32, i32, i32) {
    %c0_i32 = arith.constant 0 : i32
    %c0_i32_0 = arith.constant 0 : i32
    return %arg0, %arg1, %c0_i32 : i32, i32, i32
  }
  func.func @transform_1(%arg0: i32, %arg1: i32) -> (i32, i32, i32, i32) {
    %c0_i32 = arith.constant 0 : i32
    %c0_i32_0 = arith.constant 0 : i32
    %c0_i32_1 = arith.constant 0 : i32
    return %arg0, %arg1, %c0_i32, %c0_i32_0 : i32, i32, i32, i32
  }
  func.func @transform_2(%arg0: i32, %arg1: i32) -> (i32, i32, i32) {
    %c0_i32 = arith.constant 0 : i32
    %c0_i32_0 = arith.constant 0 : i32
    %c0_i32_1 = arith.constant 0 : i32
    %c0_i32_2 = arith.constant 0 : i32
    return %c0_i32, %c0_i32_0, %c0_i32_1 : i32, i32, i32
  }
  func.func @transform_3(%arg0: i32, %arg1: i32) -> (i32, i32, i32) {
    %c0_i32 = arith.constant 0 : i32
    %c0_i32_0 = arith.constant 0 : i32
    return %arg0, %arg1, %c0_i32 : i32, i32, i32
  }
  func.func @transform_4(%arg0: i32, %arg1: i32) -> (i32, i32, i32) {
    %c0_i32 = arith.constant 0 : i32
    %c0_i32_0 = arith.constant 0 : i32
    %c0_i32_1 = arith.constant 0 : i32
    return %arg0, %c0_i32, %c0_i32_0 : i32, i32, i32
  }
}

module attributes {stable_mosaic.version = 11 : i64} {
  func.func @_phase2_kernel(%arg0: i32, %arg1: i32, %arg2: memref<1x16x128xbf16, #tpu.memory_space<vmem>>, %arg3: memref<1x128xf32, #tpu.memory_space<vmem>>, %arg4: memref<1x128xf32, #tpu.memory_space<vmem>>, %arg5: memref<1x128x16xf32, #tpu.memory_space<vmem>>) attributes {dimension_semantics = [#tpu.dimension_semantics<parallel>, #tpu.dimension_semantics<parallel>], iteration_bounds = array<i64: 2, 1>, scalar_prefetch = 0 : i64, scratch_operands = 0 : i64, tpu.core_type = #tpu.core_type<tc>, window_params = [{transform_indices = @transform_0, window_bounds = array<i64: 1, 16, 128>}, {pipeline_mode = #tpu.pipeline_mode<synchronous>, transform_indices = @transform_1, window_bounds = array<i64: 1, 128>}, {pipeline_mode = #tpu.pipeline_mode<synchronous>, transform_indices = @transform_2, window_bounds = array<i64: 1, 128>}, {transform_indices = @transform_3, window_bounds = array<i64: 1, 128, 16>}]} {
    %c0 = arith.constant 0 : index
    %c0_0 = arith.constant 0 : index
    %c0_1 = arith.constant 0 : index
    %0 = vector.load %arg2[%c0, %c0_0, %c0_1] : memref<1x16x128xbf16, #tpu.memory_space<vmem>>, vector<1x16x128xbf16>
    %1 = vector.shape_cast %0 : vector<1x16x128xbf16> to vector<16x128xbf16>
    %2 = arith.extf %1 : vector<16x128xbf16> to vector<16x128xf32>
    %c0_2 = arith.constant 0 : index
    %c0_3 = arith.constant 0 : index
    %3 = vector.load %arg3[%c0_2, %c0_3] : memref<1x128xf32, #tpu.memory_space<vmem>>, vector<1x128xf32>
    %4 = vector.broadcast %3 : vector<1x128xf32> to vector<16x128xf32>
    %5 = arith.mulf %2, %4 : vector<16x128xf32>
    %c0_4 = arith.constant 0 : index
    %c0_5 = arith.constant 0 : index
    %6 = vector.load %arg4[%c0_4, %c0_5] : memref<1x128xf32, #tpu.memory_space<vmem>>, vector<1x128xf32>
    %7 = vector.broadcast %6 : vector<1x128xf32> to vector<16x128xf32>
    %8 = arith.addf %5, %7 : vector<16x128xf32>
    %cst = arith.constant 0.000000e+00 : f32
    %9 = vector.broadcast %cst : f32 to vector<16x128xf32>
    %10 = arith.maximumf %8, %9 : vector<16x128xf32>
    %11 = tpu.transpose %10, [1, 0] : vector<16x128xf32> -> vector<128x16xf32>
    %c0_6 = arith.constant 0 : index
    %c0_7 = arith.constant 0 : index
    %c0_8 = arith.constant 0 : index
    %12 = vector.load %arg5[%c0_6, %c0_7, %c0_8] : memref<1x128x16xf32, #tpu.memory_space<vmem>>, vector<1x128x16xf32>
    %13 = vector.shape_cast %12 : vector<1x128x16xf32> to vector<128x16xf32>
    %14 = vector.shape_cast %11 : vector<128x16xf32> to vector<1x128x16xf32>
    tpu.vector_store %arg5[%c0_6, %c0_7, %c0_8], %14 {strides = array<i32>} : memref<1x128x16xf32, #tpu.memory_space<vmem>>, vector<1x128x16xf32>,
    return
  }
  func.func @transform_0(%arg0: i32, %arg1: i32) -> (i32, i32, i32) {
    %c0_i32 = arith.constant 0 : i32
    %c0_i32_0 = arith.constant 0 : i32
    return %arg0, %arg1, %c0_i32 : i32, i32, i32
  }
  func.func @transform_1(%arg0: i32, %arg1: i32) -> (i32, i32) {
    %c0_i32 = arith.constant 0 : i32
    %c0_i32_0 = arith.constant 0 : i32
    %c0_i32_1 = arith.constant 0 : i32
    return %c0_i32, %c0_i32_0 : i32, i32
  }
  func.func @transform_2(%arg0: i32, %arg1: i32) -> (i32, i32) {
    %c0_i32 = arith.constant 0 : i32
    %c0_i32_0 = arith.constant 0 : i32
    %c0_i32_1 = arith.constant 0 : i32
    return %c0_i32, %c0_i32_0 : i32, i32
  }
  func.func @transform_3(%arg0: i32, %arg1: i32) -> (i32, i32, i32) {
    %c0_i32 = arith.constant 0 : i32
    %c0_i32_0 = arith.constant 0 : i32
    return %arg0, %c0_i32, %arg1 : i32, i32, i32
  }
}

</mosaic_0001>

<llo_original>
// kernel: multi_scale_block.3
$region0: #{multi_scale_block.3}
  #allocation0 [shape = 'u32[]', space=smem, size = 0x4, offset = 0x4, fixed_abs, tag = 'smem constant byte address 0x4 - core index']
  #allocation1 [shape = 'u32[144,128]{1,0:T(1,128)}', space=vmem, size = 0x12000, scoped, tag = 'internal scratch']
  %s0 = inlined_call_operand.vmem [shape: bf16[2,16,128], index: 0, kind: input, shape index: {}]
  %s1 = inlined_call_operand.vmem [shape: f32[1,128], index: 1, kind: input, shape index: {}]
  %s2 = inlined_call_operand.vmem [shape: f32[1,128], index: 2, kind: input, shape index: {}]
  %s3 = inlined_call_operand.vmem [shape: f32[2,128,16], index: 3, kind: output, shape index: {}]
  %s4 = sld [smem:[#allocation0]]
  $region45: #{multi_scale_block.3} parent=0
    _
  %s6 = ssub.s32 1, %s4
  %s7 = scalar_select 0, %s6, %s4
  loop: start=0, step=1, limit=4
  $region2: #{multi_scale_block.3} parent=0 // loop_pre_header
    _
  $region3: #{multi_scale_block.3} parent=0 // loop_header
    %s9 = sphi 0, %s13
    %p10 = scmp.ge.s32.totalorder %s9, 4
    %s16 = sphi 0, %s28
    %s17 = sphi 0, %s24
    %s18 = sphi 0, %s16
    %s19 = sphi 0, %s17
    %s20 = sphi 0, %s18
    %s21 = sphi 0, %s19
    %s33 = sphi 0, %s35
    %s36 = sphi 0, %s33
    %s37 = sphi 0, %s36
    %s53 = sphi 0, %s37
    %s57 = sphi 0, %s57
    %s59 = sphi 0, %s57
    %s60 = sphi 0, %s59
    %s74 = sphi 0, %s60
    %s78 = sphi 0, %s78
    %s80 = sphi 0, %s78
    %s81 = sphi 0, %s80
    %s95 = sphi 0, %s81
    %s103 = sphi 0, %s105
    %s106 = sphi 0, %s103
    %s107 = sphi 0, %s106
    %s123 = sphi 0, %s107
  $region4: #{multi_scale_block.3} parent=0 // loop_header_branch
    %12 = sbr.rel (%p10) target = $region8
  $region5: #{multi_scale_block.3} parent=0 // loop_body
    %s14 = ssub.s32 %s9, 1
    %s15 = ssub.s32 %s9, 2
    %s22 = sadd.s32 1, %s17
    %p23 = scmp.ge.s32.totalorder %s22, 1
    %s24 = scalar_select %p23, 0, %s22
    %s25 = sadd.s32 1, %s16
    %s26 = scalar_select %p23, %s25, %s16
    %p27 = scmp.ge.s32.totalorder %s26, 2
    %s28 = scalar_select %p27, 0, %s26
    %s29 = ssub.s32 %s16, %s28
    %s30 = ssub.s32 %s17, %s24
    %s31 = sor.u32 %s29, %s30
    %p32 = scmp.eq.s32.totalorder %s31, 0
    %s34 = sadd.s32 %s33, 1
    %s35 = scalar_select %p32, %s33, %s34
    %p38 = pneg %p32
    %p39 = scmp.eq.s32.totalorder %s9, 1
    %p40 = por %p38, %p39
    %p41 = scmp.ne.s32.totalorder %s33, %s36
    %p42 = scmp.eq.s32.totalorder %s9, 0
    %p43 = por %p41, %p42
    %p44 = scmp.ne.s32.totalorder %s33, %s36
    %p45 = scmp.eq.s32.totalorder %s14, 1
    %p46 = por %p44, %p45
    %p47 = scmp.ne.s32.totalorder %s36, %s37
    %p48 = scmp.eq.s32.totalorder %s14, 0
    %p49 = por %p47, %p48
    %p50 = scmp.ne.s32.totalorder %s36, %s37
    %p51 = scmp.eq.s32.totalorder %s15, 1
    %p52 = por %p50, %p51
    %p54 = scmp.ne.s32.totalorder %s37, %s53
    %p55 = scmp.eq.s32.totalorder %s15, 0
    %p56 = por %p54, %p55
    %s58 = sadd.s32 %s57, 1
    %p61 = scmp.eq.s32.totalorder %s9, 1
    %p62 = scmp.ne.s32.totalorder %s57, %s59
    %p63 = scmp.eq.s32.totalorder %s9, 0
    %p64 = por %p62, %p63
    %p65 = scmp.ne.s32.totalorder %s57, %s59
    %p66 = scmp.eq.s32.totalorder %s14, 1
    %p67 = por %p65, %p66
    %p68 = scmp.ne.s32.totalorder %s59, %s60
    %p69 = scmp.eq.s32.totalorder %s14, 0
    %p70 = por %p68, %p69
    %p71 = scmp.ne.s32.totalorder %s59, %s60
    %p72 = scmp.eq.s32.totalorder %s15, 1
    %p73 = por %p71, %p72
    %p75 = scmp.ne.s32.totalorder %s60, %s74
    %p76 = scmp.eq.s32.totalorder %s15, 0
    %p77 = por %p75, %p76
    %s79 = sadd.s32 %s78, 1
    %p82 = scmp.eq.s32.totalorder %s9, 1
    %p83 = scmp.ne.s32.totalorder %s78, %s80
    %p84 = scmp.eq.s32.totalorder %s9, 0
    %p85 = por %p83, %p84
    %p86 = scmp.ne.s32.totalorder %s78, %s80
    %p87 = scmp.eq.s32.totalorder %s14, 1
    %p88 = por %p86, %p87
    %p89 = scmp.ne.s32.totalorder %s80, %s81
    %p90 = scmp.eq.s32.totalorder %s14, 0
    %p91 = por %p89, %p90
    %p92 = scmp.ne.s32.totalorder %s80, %s81
    %p93 = scmp.eq.s32.totalorder %s15, 1
    %p94 = por %p92, %p93
    %p96 = scmp.ne.s32.totalorder %s81, %s95
    %p97 = scmp.eq.s32.totalorder %s15, 0
    %p98 = por %p96, %p97
    %s99 = ssub.s32 %s16, %s28
    %s100 = ssub.s32 %s17, %s24
    %s101 = sor.u32 %s99, %s100
    %p102 = scmp.eq.s32.totalorder %s101, 0
    %s104 = sadd.s32 %s103, 1
    %s105 = scalar_select %p102, %s103, %s104
    %p108 = pneg %p102
    %p109 = scmp.eq.s32.totalorder %s9, 1
    %p110 = por %p108, %p109
    %p111 = scmp.ne.s32.totalorder %s103, %s106
    %p112 = scmp.eq.s32.totalorder %s9, 0
    %p113 = por %p111, %p112
    %p114 = scmp.ne.s32.totalorder %s103, %s106
    %p115 = scmp.eq.s32.totalorder %s14, 1
    %p116 = por %p114, %p115
    %p117 = scmp.ne.s32.totalorder %s106, %s107
    %p118 = scmp.eq.s32.totalorder %s14, 0
    %p119 = por %p117, %p118
    %p120 = scmp.ne.s32.totalorder %s106, %s107
    %p121 = scmp.eq.s32.totalorder %s15, 1
    %p122 = por %p120, %p121
    %p124 = scmp.ne.s32.totalorder %s107, %s123
    %p125 = scmp.eq.s32.totalorder %s15, 0
    %p126 = por %p124, %p125
    %p127 = scmp.le.s32.totalorder 1, %s9
    %p128 = scmp.lt.s32.totalorder %s9, 3
    %p129 = pnand %p127, %p128
    %p130 = pneg %p129
    // Predicated region
    $region9: #{multi_scale_block.3} parent=5 // pred_check
      _
    $region10: #{multi_scale_block.3} parent=5 // pred_check_branch
      %132 = sbr.rel (%p129) target = $region12
    $region11: #{multi_scale_block.3} parent=5 // pred_region
      %s133 = ssub.s32 %s9, 1
      // Predicated region
      $region13: #{multi_scale_block.3} parent=11 // pred_check
        %p134 = pneg %p70
      $region14: #{multi_scale_block.3} parent=11 // pred_check_branch
        %136 = sbr.rel (%p134) target = $region16
      $region15: #{multi_scale_block.3} parent=11 // pred_region
        _
      $region16: #{multi_scale_block.3} parent=11 // pred_fallthru
        _
      // Predicated region
      $region17: #{multi_scale_block.3} parent=11 // pred_check
        %p137 = pneg %p91
      $region18: #{multi_scale_block.3} parent=11 // pred_check_branch
        %139 = sbr.rel (%p137) target = $region20
      $region19: #{multi_scale_block.3} parent=11 // pred_region
        _
      $region20: #{multi_scale_block.3} parent=11 // pred_fallthru
        _
    $region12: #{multi_scale_block.3} parent=5 // pred_fallthru
      _
    %p140 = scmp.lt.s32.totalorder %s9, 2
    // Predicated region
    $region21: #{multi_scale_block.3} parent=5 // pred_check
      %p141 = pneg %p140
    $region22: #{multi_scale_block.3} parent=5 // pred_check_branch
      %143 = sbr.rel (%p141) target = $region24
    $region23: #{multi_scale_block.3} parent=5 // pred_region
      // Predicated region
      $region25: #{multi_scale_block.3} parent=23 // pred_check
        %p144 = pneg %p43
      $region26: #{multi_scale_block.3} parent=23 // pred_check_branch
        %146 = sbr.rel (%p144) target = $region28
      $region27: #{multi_scale_block.3} parent=23 // pred_region
        %s147 = smul.u32 2, %s17
        %p148 = scmp.lt.s32.totalorder %s16, 1
        %s149 = scalar_select %p148, %s16, 1
        %p150 = scmp.lt.s32.totalorder %s147, 1
        %s151 = scalar_select %p150, %s147, 1
        %s152 = smul.addr %s149, 2
        %s153 = sadd.s32 %s151, %s152
        %s154 = smul.addr %s153, 4
        %s155 = scalar_lea.vmem %s0, %s154
        %s156 = smul.u32 2, %s17
      $region28: #{multi_scale_block.3} parent=23 // pred_fallthru
        _
    $region24: #{multi_scale_block.3} parent=5 // pred_fallthru
      _
    %p157 = scmp.le.s32.totalorder 1, %s9
    %p158 = scmp.lt.s32.totalorder %s9, 3
    %p159 = pnand %p157, %p158
    %p160 = pneg %p159
    // Predicated region
    $region29: #{multi_scale_block.3} parent=5 // pred_check
      _
    $region30: #{multi_scale_block.3} parent=5 // pred_check_branch
      %162 = sbr.rel (%p159) target = $region32
    $region31: #{multi_scale_block.3} parent=5 // pred_region
      %s163 = ssub.s32 %s9, 1
      %s164 = smul.u32 2, %s19
      %p165 = scmp.lt.s32.totalorder %s18, 1
      %s166 = scalar_select %p165, %s18, 1
      %p167 = scmp.lt.s32.totalorder %s164, 1
      %s168 = scalar_select %p167, %s164, 1
      %s169 = smul.addr %s166, 2
      %s170 = sadd.s32 %s168, %s169
      %s171 = smul.addr %s170, 4
      %s172 = scalar_lea.vmem %s0, %s171
      %p173 = pneg %p49
      %p174 = pneg %p46
      %p175 = pneg %p70
      %p176 = pneg %p67
      %p177 = pneg %p91
      %p178 = pneg %p88
      %p179 = pneg %p119
      %p180 = pneg %p116
      %p181 = scmp.lt.s32.totalorder %s18, 1
      %s182 = scalar_select %p181, %s18, 1
      %p183 = scmp.lt.s32.totalorder %s19, 0
      %s184 = scalar_select %p183, %s19, 0
      %s185 = smul.addr %s182, 16
      %s186 = sadd.s32 %s184, %s185
      %s187 = smul.addr %s186, 8
      %s188 = scalar_lea.vmem %s3, %s187
      %s189 = smul.u32 2, %s19
      %p190 = scmp.lt.s32.totalorder %s18, 1
      %s191 = scalar_select %p190, %s18, 1
      %p192 = scmp.lt.s32.totalorder %s189, 1
      %s193 = scalar_select %p192, %s189, 1
      %s194 = smul.addr %s191, 2
      %s195 = sadd.s32 %s193, %s194
      %s196 = smul.addr %s195, 4
      %s197 = scalar_lea.vmem %s0, %s196
      %s198 = smul.u32 2, %s19
      %p199 = scmp.lt.s32.totalorder %s18, 1
      %s200 = scalar_select %p199, %s18, 1
      %p201 = scmp.lt.s32.totalorder %s19, 0
      %s202 = scalar_select %p201, %s19, 0
      %s203 = smul.addr %s200, 16
      %s204 = sadd.s32 %s202, %s203
      %s205 = smul.addr %s204, 8
      %s206 = scalar_lea.vmem %s3, %s205
      %v207 = vld [vmem:[%s197] sm:$0xf]
      %v208 = vld [vmem:[%s197 + $0x4] sm:$0xf]
      %v209 = vunpack.c.l.bf16 %v207
      %v210 = vunpack.c.l.bf16 %v208
      %v211 = vld [vmem:[%s1] sm:$0x1]
      %v213 = vlaneseq
      %v214 = vshrl.u32 %v213, 7
      %v215 = vsub.s32 0, %v214
      %v216 = vrot.slane %v211, %v215
      %v218 = vmul.f32 %v209, %v216
      %v219 = vmul.f32 %v210, %v216
      %v220 = vld [vmem:[%s2] sm:$0x1]
      %v222 = vlaneseq
      %v223 = vshrl.u32 %v222, 7
      %v224 = vsub.s32 0, %v223
      %v225 = vrot.slane %v220, %v224
      %v227 = vadd.f32 %v218, %v225
      %v228 = vadd.f32 %v219, %v225
      %v229 = vmax.f32 %v227, 0.0
      %v230 = vmax.f32 %v228, 0.0
      %231 = vxpose.xlu0.b32.start [1/16] %v229, 128
      %232 = vxpose.xlu0.b32.cont [2/16] %v230, 128
      %233 = vxpose.xlu0.b32.cont [3/16] 0.0, 128
      %234 = vxpose.xlu0.b32.cont [4/16] 0.0, 128
      %235 = vxpose.xlu0.b32.cont [5/16] 0.0, 128
      %236 = vxpose.xlu0.b32.cont [6/16] 0.0, 128
      %237 = vxpose.xlu0.b32.cont [7/16] 0.0, 128
      %238 = vxpose.xlu0.b32.cont [8/16] 0.0, 128
      %239 = vxpose.xlu0.b32.cont [9/16] 0.0, 128
      %240 = vxpose.xlu0.b32.cont [10/16] 0.0, 128
      %241 = vxpose.xlu0.b32.cont [11/16] 0.0, 128
      %242 = vxpose.xlu0.b32.cont [12/16] 0.0, 128
      %243 = vxpose.xlu0.b32.cont [13/16] 0.0, 128
      %244 = vxpose.xlu0.b32.cont [14/16] 0.0, 128
      %245 = vxpose.xlu0.b32.cont [15/16] 0.0, 128
      %246 = vxpose.xlu0.b32.end [16/16] 0.0, 128
      %v247 = vpop.trf.xlu0
      %v248 = vpop.trf.xlu0
      %v249 = vpop.trf.xlu0
      %v250 = vpop.trf.xlu0
      %v251 = vpop.trf.xlu0
      %v252 = vpop.trf.xlu0
      %v253 = vpop.trf.xlu0
      %v254 = vpop.trf.xlu0
      %v255 = vpop.trf.xlu0
      %v256 = vpop.trf.xlu0
      %v257 = vpop.trf.xlu0
      %v258 = vpop.trf.xlu0
      %v259 = vpop.trf.xlu0
      %v260 = vpop.trf.xlu0
      %v261 = vpop.trf.xlu0
      %v262 = vpop.trf.xlu0
      %vm263 = vcmask 130048
      %264 = vst.msk [vmem:[%s206] sm:$0xff] %vm263, %v247
      %265 = vst.msk [vmem:[%s206 + $0x8] sm:$0xff] %vm263, %v248
      %266 = vst.msk [vmem:[%s206 + $0x10] sm:$0xff] %vm263, %v249
      %267 = vst.msk [vmem:[%s206 + $0x18] sm:$0xff] %vm263, %v250
      %268 = vst.msk [vmem:[%s206 + $0x20] sm:$0xff] %vm263, %v251
      %269 = vst.msk [vmem:[%s206 + $0x28] sm:$0xff] %vm263, %v252
      %270 = vst.msk [vmem:[%s206 + $0x30] sm:$0xff] %vm263, %v253
      %271 = vst.msk [vmem:[%s206 + $0x38] sm:$0xff] %vm263, %v254
      %272 = vst.msk [vmem:[%s206 + $0x40] sm:$0xff] %vm263, %v255
      %273 = vst.msk [vmem:[%s206 + $0x48] sm:$0xff] %vm263, %v256
      %274 = vst.msk [vmem:[%s206 + $0x50] sm:$0xff] %vm263, %v257
      %275 = vst.msk [vmem:[%s206 + $0x58] sm:$0xff] %vm263, %v258
      %276 = vst.msk [vmem:[%s206 + $0x60] sm:$0xff] %vm263, %v259
      %277 = vst.msk [vmem:[%s206 + $0x68] sm:$0xff] %vm263, %v260
      %278 = vst.msk [vmem:[%s206 + $0x70] sm:$0xff] %vm263, %v261
      %279 = vst.msk [vmem:[%s206 + $0x78] sm:$0xff] %vm263, %v262
      %p280 = scmp.lt.s32.totalorder %s18, 1
      %s281 = scalar_select %p280, %s18, 1
      %p282 = scmp.lt.s32.totalorder %s19, 0
      %s283 = scalar_select %p282, %s19, 0
      %s284 = smul.addr %s281, 16
      %s285 = sadd.s32 %s283, %s284
      %s286 = smul.addr %s285, 8
      %s287 = scalar_lea.vmem %s3, %s286
      // Predicated region
      $region33: #{multi_scale_block.3} parent=31 // pred_check
        %p288 = pneg %p116
      $region34: #{multi_scale_block.3} parent=31 // pred_check_branch
        %290 = sbr.rel (%p288) target = $region36
      $region35: #{multi_scale_block.3} parent=31 // pred_region
        _
      $region36: #{multi_scale_block.3} parent=31 // pred_fallthru
        _
    $region32: #{multi_scale_block.3} parent=5 // pred_fallthru
      _
    %p291 = scmp.le.s32.totalorder 2, %s9
    // Predicated region
    $region37: #{multi_scale_block.3} parent=5 // pred_check
      %p292 = pneg %p291
    $region38: #{multi_scale_block.3} parent=5 // pred_check_branch
      %294 = sbr.rel (%p292) target = $region40
    $region39: #{multi_scale_block.3} parent=5 // pred_region
      %s295 = ssub.s32 %s9, 2
      // Predicated region
      $region41: #{multi_scale_block.3} parent=39 // pred_check
        %p296 = pneg %p122
      $region42: #{multi_scale_block.3} parent=39 // pred_check_branch
        %298 = sbr.rel (%p296) target = $region44
      $region43: #{multi_scale_block.3} parent=39 // pred_region
        %p299 = scmp.lt.s32.totalorder %s20, 1
        %s300 = scalar_select %p299, %s20, 1
        %p301 = scmp.lt.s32.totalorder %s21, 0
        %s302 = scalar_select %p301, %s21, 0
        %s303 = smul.addr %s300, 16
        %s304 = sadd.s32 %s302, %s303
        %s305 = smul.addr %s304, 8
        %s306 = scalar_lea.vmem %s3, %s305
      $region44: #{multi_scale_block.3} parent=39 // pred_fallthru
        _
    $region40: #{multi_scale_block.3} parent=5 // pred_fallthru
      _
  $region6: #{multi_scale_block.3} parent=0 // loop_footer
    %s13 = sadd.s32 1, %s9
  $region7: #{multi_scale_block.3} parent=0 // loop_footer_branch
    %8 = sbr.rel target = $region3
  $region8: #{multi_scale_block.3} parent=0 // loop_exit
    _

// kernel: multi_scale_block.2
$region0: #{multi_scale_block.2}
  #allocation0 [shape = 'u32[]', space=smem, size = 0x4, offset = 0x4, fixed_abs, tag = 'smem constant byte address 0x4 - core index']
  #allocation1 [shape = 'u32[144,128]{1,0:T(1,128)}', space=vmem, size = 0x12000, scoped, tag = 'internal scratch']
  #allocation2 [shape = 'bf16[24,128]{1,0:T(8,128)(2,1)}', space=vmem, size = 0x1800, scoped, tag = 'scratch operand']
  %s0 = inlined_call_operand.vmem [shape: bf16[2,16,128], index: 0, kind: input, shape index: {}]
  %s1 = inlined_call_operand.vmem [shape: bf16[2,1,8,128], index: 1, kind: input, shape index: {}]
  %s2 = inlined_call_operand.vmem [shape: bf16[7,128,128], index: 2, kind: input, shape index: {}]
  %s3 = inlined_call_operand.vmem [shape: bf16[2,16,128], index: 3, kind: output, shape index: {0}]
  %s4 = inlined_call_operand.vmem [shape: f32[2,2,128], index: 4, kind: output, shape index: {1}]
  %5 = xla_tuple %s3, %s4
  %s6 = sld [smem:[#allocation0]]
  $region61: #{multi_scale_block.2} parent=0
    _
  %s8 = ssub.s32 1, %s6
  %s9 = scalar_select 0, %s8, %s6
  loop: start=0, step=1, limit=4
  $region2: #{multi_scale_block.2} parent=0 // loop_pre_header
    _
  $region3: #{multi_scale_block.2} parent=0 // loop_header
    %s11 = sphi 0, %s15
    %p12 = scmp.ge.s32.totalorder %s11, 4
    %s18 = sphi 0, %s30
    %s19 = sphi 0, %s26
    %s20 = sphi 0, %s18
    %s21 = sphi 0, %s19
    %s22 = sphi 0, %s20
    %s23 = sphi 0, %s21
    %s35 = sphi 0, %s37
    %s38 = sphi 0, %s35
    %s39 = sphi 0, %s38
    %s55 = sphi 0, %s39
    %s63 = sphi 0, %s65
    %s66 = sphi 0, %s63
    %s67 = sphi 0, %s66
    %s83 = sphi 0, %s67
    %s87 = sphi 0, %s87
    %s89 = sphi 0, %s87
    %s90 = sphi 0, %s89
    %s104 = sphi 0, %s90
    %s112 = sphi 0, %s114
    %s115 = sphi 0, %s112
    %s116 = sphi 0, %s115
    %s132 = sphi 0, %s116
    %s138 = sphi 0, %s140
    %s141 = sphi 0, %s138
    %s142 = sphi 0, %s141
    %s158 = sphi 0, %s142
  $region4: #{multi_scale_block.2} parent=0 // loop_header_branch
    %14 = sbr.rel (%p12) target = $region8
  $region5: #{multi_scale_block.2} parent=0 // loop_body
    %s16 = ssub.s32 %s11, 1
    %s17 = ssub.s32 %s11, 2
    %s24 = sadd.s32 1, %s19
    %p25 = scmp.ge.s32.totalorder %s24, 1
    %s26 = scalar_select %p25, 0, %s24
    %s27 = sadd.s32 1, %s18
    %s28 = scalar_select %p25, %s27, %s18
    %p29 = scmp.ge.s32.totalorder %s28, 2
    %s30 = scalar_select %p29, 0, %s28
    %s31 = ssub.s32 %s18, %s30
    %s32 = ssub.s32 %s19, %s26
    %s33 = sor.u32 %s31, %s32
    %p34 = scmp.eq.s32.totalorder %s33, 0
    %s36 = sadd.s32 %s35, 1
    %s37 = scalar_select %p34, %s35, %s36
    %p40 = pneg %p34
    %p41 = scmp.eq.s32.totalorder %s11, 1
    %p42 = por %p40, %p41
    %p43 = scmp.ne.s32.totalorder %s35, %s38
    %p44 = scmp.eq.s32.totalorder %s11, 0
    %p45 = por %p43, %p44
    %p46 = scmp.ne.s32.totalorder %s35, %s38
    %p47 = scmp.eq.s32.totalorder %s16, 1
    %p48 = por %p46, %p47
    %p49 = scmp.ne.s32.totalorder %s38, %s39
    %p50 = scmp.eq.s32.totalorder %s16, 0
    %p51 = por %p49, %p50
    %p52 = scmp.ne.s32.totalorder %s38, %s39
    %p53 = scmp.eq.s32.totalorder %s17, 1
    %p54 = por %p52, %p53
    %p56 = scmp.ne.s32.totalorder %s39, %s55
    %p57 = scmp.eq.s32.totalorder %s17, 0
    %p58 = por %p56, %p57
    %s59 = ssub.s32 %s18, %s30
    %s60 = ssub.s32 %s19, %s26
    %s61 = sor.u32 %s59, %s60
    %p62 = scmp.eq.s32.totalorder %s61, 0
    %s64 = sadd.s32 %s63, 1
    %s65 = scalar_select %p62, %s63, %s64
    %p68 = pneg %p62
    %p69 = scmp.eq.s32.totalorder %s11, 1
    %p70 = por %p68, %p69
    %p71 = scmp.ne.s32.totalorder %s63, %s66
    %p72 = scmp.eq.s32.totalorder %s11, 0
    %p73 = por %p71, %p72
    %p74 = scmp.ne.s32.totalorder %s63, %s66
    %p75 = scmp.eq.s32.totalorder %s16, 1
    %p76 = por %p74, %p75
    %p77 = scmp.ne.s32.totalorder %s66, %s67
    %p78 = scmp.eq.s32.totalorder %s16, 0
    %p79 = por %p77, %p78
    %p80 = scmp.ne.s32.totalorder %s66, %s67
    %p81 = scmp.eq.s32.totalorder %s17, 1
    %p82 = por %p80, %p81
    %p84 = scmp.ne.s32.totalorder %s67, %s83
    %p85 = scmp.eq.s32.totalorder %s17, 0
    %p86 = por %p84, %p85
    %s88 = sadd.s32 %s87, 1
    %p91 = scmp.eq.s32.totalorder %s11, 1
    %p92 = scmp.ne.s32.totalorder %s87, %s89
    %p93 = scmp.eq.s32.totalorder %s11, 0
    %p94 = por %p92, %p93
    %p95 = scmp.ne.s32.totalorder %s87, %s89
    %p96 = scmp.eq.s32.totalorder %s16, 1
    %p97 = por %p95, %p96
    %p98 = scmp.ne.s32.totalorder %s89, %s90
    %p99 = scmp.eq.s32.totalorder %s16, 0
    %p100 = por %p98, %p99
    %p101 = scmp.ne.s32.totalorder %s89, %s90
    %p102 = scmp.eq.s32.totalorder %s17, 1
    %p103 = por %p101, %p102
    %p105 = scmp.ne.s32.totalorder %s90, %s104
    %p106 = scmp.eq.s32.totalorder %s17, 0
    %p107 = por %p105, %p106
    %s108 = ssub.s32 %s18, %s30
    %s109 = ssub.s32 %s19, %s26
    %s110 = sor.u32 %s108, %s109
    %p111 = scmp.eq.s32.totalorder %s110, 0
    %s113 = sadd.s32 %s112, 1
    %s114 = scalar_select %p111, %s112, %s113
    %p117 = pneg %p111
    %p118 = scmp.eq.s32.totalorder %s11, 1
    %p119 = por %p117, %p118
    %p120 = scmp.ne.s32.totalorder %s112, %s115
    %p121 = scmp.eq.s32.totalorder %s11, 0
    %p122 = por %p120, %p121
    %p123 = scmp.ne.s32.totalorder %s112, %s115
    %p124 = scmp.eq.s32.totalorder %s16, 1
    %p125 = por %p123, %p124
    %p126 = scmp.ne.s32.totalorder %s115, %s116
    %p127 = scmp.eq.s32.totalorder %s16, 0
    %p128 = por %p126, %p127
    %p129 = scmp.ne.s32.totalorder %s115, %s116
    %p130 = scmp.eq.s32.totalorder %s17, 1
    %p131 = por %p129, %p130
    %p133 = scmp.ne.s32.totalorder %s116, %s132
    %p134 = scmp.eq.s32.totalorder %s17, 0
    %p135 = por %p133, %p134
    %s136 = ssub.s32 %s18, %s30
    %p137 = scmp.eq.s32.totalorder %s136, 0
    %s139 = sadd.s32 %s138, 1
    %s140 = scalar_select %p137, %s138, %s139
    %p143 = pneg %p137
    %p144 = scmp.eq.s32.totalorder %s11, 1
    %p145 = por %p143, %p144
    %p146 = scmp.ne.s32.totalorder %s138, %s141
    %p147 = scmp.eq.s32.totalorder %s11, 0
    %p148 = por %p146, %p147
    %p149 = scmp.ne.s32.totalorder %s138, %s141
    %p150 = scmp.eq.s32.totalorder %s16, 1
    %p151 = por %p149, %p150
    %p152 = scmp.ne.s32.totalorder %s141, %s142
    %p153 = scmp.eq.s32.totalorder %s16, 0
    %p154 = por %p152, %p153
    %p155 = scmp.ne.s32.totalorder %s141, %s142
    %p156 = scmp.eq.s32.totalorder %s17, 1
    %p157 = por %p155, %p156
    %p159 = scmp.ne.s32.totalorder %s142, %s158
    %p160 = scmp.eq.s32.totalorder %s17, 0
    %p161 = por %p159, %p160
    %p162 = scmp.le.s32.totalorder 1, %s11
    %p163 = scmp.lt.s32.totalorder %s11, 3
    %p164 = pnand %p162, %p163
    %p165 = pneg %p164
    // Predicated region
    $region9: #{multi_scale_block.2} parent=5 // pred_check
      _
    $region10: #{multi_scale_block.2} parent=5 // pred_check_branch
      %167 = sbr.rel (%p164) target = $region12
    $region11: #{multi_scale_block.2} parent=5 // pred_region
      %s168 = ssub.s32 %s11, 1
      // Predicated region
      $region13: #{multi_scale_block.2} parent=11 // pred_check
        %p169 = pneg %p100
      $region14: #{multi_scale_block.2} parent=11 // pred_check_branch
        %171 = sbr.rel (%p169) target = $region16
      $region15: #{multi_scale_block.2} parent=11 // pred_region
        _
      $region16: #{multi_scale_block.2} parent=11 // pred_fallthru
        _
    $region12: #{multi_scale_block.2} parent=5 // pred_fallthru
      _
    %p172 = scmp.lt.s32.totalorder %s11, 2
    // Predicated region
    $region17: #{multi_scale_block.2} parent=5 // pred_check
      %p173 = pneg %p172
    $region18: #{multi_scale_block.2} parent=5 // pred_check_branch
      %175 = sbr.rel (%p173) target = $region20
    $region19: #{multi_scale_block.2} parent=5 // pred_region
      // Predicated region
      $region21: #{multi_scale_block.2} parent=19 // pred_check
        %p176 = pneg %p45
      $region22: #{multi_scale_block.2} parent=19 // pred_check_branch
        %178 = sbr.rel (%p176) target = $region24
      $region23: #{multi_scale_block.2} parent=19 // pred_region
        %s179 = smul.u32 2, %s19
        %p180 = scmp.lt.s32.totalorder %s18, 1
        %s181 = scalar_select %p180, %s18, 1
        %p182 = scmp.lt.s32.totalorder %s179, 1
        %s183 = scalar_select %p182, %s179, 1
        %s184 = smul.addr %s181, 2
        %s185 = sadd.s32 %s183, %s184
        %s186 = smul.addr %s185, 4
        %s187 = scalar_lea.vmem %s0, %s186
        %s188 = smul.u32 2, %s19
      $region24: #{multi_scale_block.2} parent=19 // pred_fallthru
        _
      // Predicated region
      $region25: #{multi_scale_block.2} parent=19 // pred_check
        %p189 = pneg %p73
      $region26: #{multi_scale_block.2} parent=19 // pred_check_branch
        %191 = sbr.rel (%p189) target = $region28
      $region27: #{multi_scale_block.2} parent=19 // pred_region
        %p192 = scmp.lt.s32.totalorder %s18, 1
        %s193 = scalar_select %p192, %s18, 1
        %p194 = scmp.lt.s32.totalorder %s19, 0
        %s195 = scalar_select %p194, %s19, 0
        %s196 = sadd.s32 %s195, %s193
        %s197 = smul.addr %s196, 4
        %s198 = scalar_lea.vmem %s1, %s197
      $region28: #{multi_scale_block.2} parent=19 // pred_fallthru
        _
    $region20: #{multi_scale_block.2} parent=5 // pred_fallthru
      _
    %p199 = scmp.le.s32.totalorder 1, %s11
    %p200 = scmp.lt.s32.totalorder %s11, 3
    %p201 = pnand %p199, %p200
    %p202 = pneg %p201
    // Predicated region
    $region29: #{multi_scale_block.2} parent=5 // pred_check
      _
    $region30: #{multi_scale_block.2} parent=5 // pred_check_branch
      %204 = sbr.rel (%p201) target = $region32
    $region31: #{multi_scale_block.2} parent=5 // pred_region
      %s205 = ssub.s32 %s11, 1
      %s206 = smul.u32 2, %s21
      %p207 = scmp.lt.s32.totalorder %s20, 1
      %s208 = scalar_select %p207, %s20, 1
      %p209 = scmp.lt.s32.totalorder %s206, 1
      %s210 = scalar_select %p209, %s206, 1
      %s211 = smul.addr %s208, 2
      %s212 = sadd.s32 %s210, %s211
      %s213 = smul.addr %s212, 4
      %s214 = scalar_lea.vmem %s0, %s213
      %p215 = pneg %p51
      %p216 = pneg %p48
      %p217 = scmp.lt.s32.totalorder %s20, 1
      %s218 = scalar_select %p217, %s20, 1
      %p219 = scmp.lt.s32.totalorder %s21, 0
      %s220 = scalar_select %p219, %s21, 0
      %s221 = sadd.s32 %s220, %s218
      %s222 = smul.addr %s221, 4
      %s223 = scalar_lea.vmem %s1, %s222
      %p224 = pneg %p79
      %p225 = pneg %p76
      %p226 = pneg %p100
      %p227 = pneg %p97
      %p228 = pneg %p128
      %p229 = pneg %p125
      %s230 = smul.u32 2, %s21
      %p231 = scmp.lt.s32.totalorder %s20, 1
      %s232 = scalar_select %p231, %s20, 1
      %p233 = scmp.lt.s32.totalorder %s230, 1
      %s234 = scalar_select %p233, %s230, 1
      %s235 = smul.addr %s232, 2
      %s236 = sadd.s32 %s234, %s235
      %s237 = smul.addr %s236, 4
      %s238 = scalar_lea.vmem %s3, %s237
      %p239 = pneg %p154
      %p240 = pneg %p151
      %p241 = scmp.lt.s32.totalorder %s20, 1
      %s242 = scalar_select %p241, %s20, 1
      %s243 = smul.addr %s242, 2
      %s244 = scalar_lea.vmem %s4, %s243
      %s245 = smul.u32 2, %s21
      %p246 = scmp.lt.s32.totalorder %s20, 1
      %s247 = scalar_select %p246, %s20, 1
      %p248 = scmp.lt.s32.totalorder %s245, 1
      %s249 = scalar_select %p248, %s245, 1
      %s250 = smul.addr %s247, 2
      %s251 = sadd.s32 %s249, %s250
      %s252 = smul.addr %s251, 4
      %s253 = scalar_lea.vmem %s0, %s252
      %s254 = smul.u32 2, %s21
      %p255 = scmp.lt.s32.totalorder %s20, 1
      %s256 = scalar_select %p255, %s20, 1
      %p257 = scmp.lt.s32.totalorder %s21, 0
      %s258 = scalar_select %p257, %s21, 0
      %s259 = sadd.s32 %s258, %s256
      %s260 = smul.addr %s259, 4
      %s261 = scalar_lea.vmem %s1, %s260
      %s262 = smul.u32 2, %s21
      %p263 = scmp.lt.s32.totalorder %s20, 1
      %s264 = scalar_select %p263, %s20, 1
      %p265 = scmp.lt.s32.totalorder %s262, 1
      %s266 = scalar_select %p265, %s262, 1
      %s267 = smul.addr %s264, 2
      %s268 = sadd.s32 %s266, %s267
      %s269 = smul.addr %s268, 4
      %s270 = scalar_lea.vmem %s3, %s269
      %s271 = smul.u32 2, %s21
      %p272 = scmp.lt.s32.totalorder %s20, 1
      %s273 = scalar_select %p272, %s20, 1
      %s274 = smul.addr %s273, 2
      %s275 = scalar_lea.vmem %s4, %s274
      %v277 = vld [vmem:[%s253] sm:$0xf]
      %v278 = vld [vmem:[%s253 + $0x4] sm:$0xf]
      %279 = vst [vmem:[#allocation2] sm:$0xf] %v277
      %280 = vst [vmem:[#allocation2 + $0x4] sm:$0xf] %v278
      %v281 = vld [vmem:[%s261] sm:$0xf]
      %282 = vst [vmem:[#allocation2 + $0x8] sm:$0xf] %v281
      %v283 = vld [vmem:[#allocation2] sm:$0xf]
      %v284 = vld [vmem:[#allocation2 + $0x4] sm:$0xf]
      %v285 = vld [vmem:[%s2] sm:$0xf]
      %v286 = vld [vmem:[%s2 + $0x4] sm:$0xf]
      %v287 = vld [vmem:[%s2 + $0x8] sm:$0xf]
      %v288 = vld [vmem:[%s2 + $0xc] sm:$0xf]
      %v289 = vld [vmem:[%s2 + $0x10] sm:$0xf]
      %v290 = vld [vmem:[%s2 + $0x14] sm:$0xf]
      %v291 = vld [vmem:[%s2 + $0x18] sm:$0xf]
      %v292 = vld [vmem:[%s2 + $0x1c] sm:$0xf]
      %v293 = vld [vmem:[%s2 + $0x20] sm:$0xf]
      %v294 = vld [vmem:[%s2 + $0x24] sm:$0xf]
      %v295 = vld [vmem:[%s2 + $0x28] sm:$0xf]
      %v296 = vld [vmem:[%s2 + $0x2c] sm:$0xf]
      %v297 = vld [vmem:[%s2 + $0x30] sm:$0xf]
      %v298 = vld [vmem:[%s2 + $0x34] sm:$0xf]
      %v299 = vld [vmem:[%s2 + $0x38] sm:$0xf]
      %v300 = vld [vmem:[%s2 + $0x3c] sm:$0xf]
      %v301 = vld [vmem:[#allocation2] sm:$0xf]
      %v302 = vld [vmem:[#allocation2 + $0x4] sm:$0xf]
      %v303 = vld [vmem:[#allocation2 + $0x8] sm:$0x1]
      %s304 = scalar_lea.vmem %s2, 64
      %v305 = vld [vmem:[%s304] sm:$0xf]
      %v306 = vld [vmem:[%s304 + $0x4] sm:$0xf]
      %v307 = vld [vmem:[%s304 + $0x8] sm:$0xf]
      %v308 = vld [vmem:[%s304 + $0xc] sm:$0xf]
      %v309 = vld [vmem:[%s304 + $0x10] sm:$0xf]
      %v310 = vld [vmem:[%s304 + $0x14] sm:$0xf]
      %v311 = vld [vmem:[%s304 + $0x18] sm:$0xf]
      %v312 = vld [vmem:[%s304 + $0x1c] sm:$0xf]
      %v313 = vld [vmem:[%s304 + $0x20] sm:$0xf]
      %v314 = vld [vmem:[%s304 + $0x24] sm:$0xf]
      %v315 = vld [vmem:[%s304 + $0x28] sm:$0xf]
      %v316 = vld [vmem:[%s304 + $0x2c] sm:$0xf]
      %v317 = vld [vmem:[%s304 + $0x30] sm:$0xf]
      %v318 = vld [vmem:[%s304 + $0x34] sm:$0xf]
      %v319 = vld [vmem:[%s304 + $0x38] sm:$0xf]
      %v320 = vld [vmem:[%s304 + $0x3c] sm:$0xf]
      %v324 = vunpack.c.l.b16 %v301
      %v325 = vunpack.c.l.b16 %v302
      %v326 = vunpack.c.l.b16 %v303
      %v327 = vpack.c.b16 %v325, %v324
      %v328 = vpack.c.b16 %v326, %v326
      %vm329 = vsmask.f32 7424
      %v331 = vshrl.u32 %v327, 16
      %v333 = vshll.u32 %v327, 16
      %v335 = vrot.slane %v333, 1
      %v336 = vor.u32 %v331, %v335
      %v338 = vshll.u32 %v328, 16
      %v340 = vrot.slane %v338, 1
      %v341 = vsel %vm329, %v336, %v340
      %v359 = vunpack.c.l.b16 %v305
      %v360 = vunpack.c.l.b16 %v306
      %v361 = vunpack.c.l.b16 %v307
      %v362 = vunpack.c.l.b16 %v308
      %v363 = vunpack.c.l.b16 %v309
      %v364 = vunpack.c.l.b16 %v310
      %v365 = vunpack.c.l.b16 %v311
      %v366 = vunpack.c.l.b16 %v312
      %v367 = vunpack.c.l.b16 %v313
      %v368 = vunpack.c.l.b16 %v314
      %v369 = vunpack.c.l.b16 %v315
      %v370 = vunpack.c.l.b16 %v316
      %v371 = vunpack.c.l.b16 %v317
      %v372 = vunpack.c.l.b16 %v318
      %v373 = vunpack.c.l.b16 %v319
      %v374 = vunpack.c.l.b16 %v320
      %v375 = vpack.c.b16 %v360, %v359
      %v376 = vpack.c.b16 %v362, %v361
      %v377 = vpack.c.b16 %v364, %v363
      %v378 = vpack.c.b16 %v366, %v365
      %v379 = vpack.c.b16 %v368, %v367
      %v380 = vpack.c.b16 %v370, %v369
      %v381 = vpack.c.b16 %v372, %v371
      %v382 = vpack.c.b16 %v374, %v373
      %391 = vmatprep.subr.bf16.mxu0 0
      %392 = vmatpush1.bf16.msra.mxu0 %v375
      %393 = vmatprep.subr.bf16.mxu0 0
      %394 = vmatpush1.bf16.msra.mxu0 %v376
      %395 = vmatprep.subr.bf16.mxu0 0
      %396 = vmatpush1.bf16.msra.mxu0 %v377
      %397 = vmatprep.subr.bf16.mxu0 0
      %398 = vmatpush1.bf16.msra.mxu0 %v378
      %399 = vmatprep.subr.bf16.mxu0 0
      %400 = vmatpush1.bf16.msra.mxu0 %v379
      %401 = vmatprep.subr.bf16.mxu0 0
      %402 = vmatpush1.bf16.msra.mxu0 %v380
      %403 = vmatprep.subr.bf16.mxu0 0
      %404 = vmatpush1.bf16.msra.mxu0 %v381
      %405 = vmatprep.subr.bf16.mxu0 0
      %406 = vmatpush1.bf16.msra.mxu0 %v382
      %407 = vmatprep.subr.bf16.mxu0 0
      %408 = vmatpush1.bf16.msra.mxu0 0
      %409 = vmatprep.subr.bf16.mxu0 0
      %410 = vmatpush1.bf16.msra.mxu0 0
      %411 = vmatprep.subr.bf16.mxu0 0
      %412 = vmatpush1.bf16.msra.mxu0 0
      %413 = vmatprep.subr.bf16.mxu0 0
      %414 = vmatpush1.bf16.msra.mxu0 0
      %415 = vmatprep.subr.bf16.mxu0 0
      %416 = vmatpush1.bf16.msra.mxu0 0
      %417 = vmatprep.subr.bf16.mxu0 0
      %418 = vmatpush1.bf16.msra.mxu0 0
      %419 = vmatprep.subr.bf16.mxu0 0
      %420 = vmatpush1.bf16.msra.mxu0 0
      %421 = vmatprep.subr.bf16.mxu0 0
      %422 = vmatpush1.bf16.msra.mxu0 0
      %423 = vmatprep.mubr.bf16.mxu0 0
      %424 = vmatmul.mubr.bf16.gmra.mrb[0].mxu0 %v341
      %v425 = vpop.f32.mrb[0].mxu0
      %v426 = vadd.f32 0.0, %v425
      %v427 = vpop.f32.mrb[0].mxu0
      %v428 = vpop.f32.mrb[0].mxu0
      %v429 = vadd.f32 0.0, %v428
      %v430 = vpop.f32.mrb[0].mxu0
      %431 = vdwg.mxu0
      %v434 = vunpack.c.l.b16 %v283
      %v435 = vunpack.c.l.b16 %v284
      %v436 = vpack.c.b16 %v435, %v434
      %v454 = vunpack.c.l.b16 %v285
      %v455 = vunpack.c.l.b16 %v286
      %v456 = vunpack.c.l.b16 %v287
      %v457 = vunpack.c.l.b16 %v288
      %v458 = vunpack.c.l.b16 %v289
      %v459 = vunpack.c.l.b16 %v290
      %v460 = vunpack.c.l.b16 %v291
      %v461 = vunpack.c.l.b16 %v292
      %v462 = vunpack.c.l.b16 %v293
      %v463 = vunpack.c.l.b16 %v294
      %v464 = vunpack.c.l.b16 %v295
      %v465 = vunpack.c.l.b16 %v296
      %v466 = vunpack.c.l.b16 %v297
      %v467 = vunpack.c.l.b16 %v298
      %v468 = vunpack.c.l.b16 %v299
      %v469 = vunpack.c.l.b16 %v300
      %v470 = vpack.c.b16 %v455, %v454
      %v471 = vpack.c.b16 %v457, %v456
      %v472 = vpack.c.b16 %v459, %v458
      %v473 = vpack.c.b16 %v461, %v460
      %v474 = vpack.c.b16 %v463, %v462
      %v475 = vpack.c.b16 %v465, %v464
      %v476 = vpack.c.b16 %v467, %v466
      %v477 = vpack.c.b16 %v469, %v468
      %486 = vmatprep.subr.bf16.mxu0 0
      %487 = vmatpush1.bf16.msra.mxu0 %v470
      %488 = vmatprep.subr.bf16.mxu0 0
      %489 = vmatpush1.bf16.msra.mxu0 %v471
      %490 = vmatprep.subr.bf16.mxu0 0
      %491 = vmatpush1.bf16.msra.mxu0 %v472
      %492 = vmatprep.subr.bf16.mxu0 0
      %493 = vmatpush1.bf16.msra.mxu0 %v473
      %494 = vmatprep.subr.bf16.mxu0 0
      %495 = vmatpush1.bf16.msra.mxu0 %v474
      %496 = vmatprep.subr.bf16.mxu0 0
      %497 = vmatpush1.bf16.msra.mxu0 %v475
      %498 = vmatprep.subr.bf16.mxu0 0
      %499 = vmatpush1.bf16.msra.mxu0 %v476
      %500 = vmatprep.subr.bf16.mxu0 0
      %501 = vmatpush1.bf16.msra.mxu0 %v477
      %502 = vmatprep.subr.bf16.mxu0 0
      %503 = vmatpush1.bf16.msra.mxu0 0
      %504 = vmatprep.subr.bf16.mxu0 0
      %505 = vmatpush1.bf16.msra.mxu0 0
      %506 = vmatprep.subr.bf16.mxu0 0
      %507 = vmatpush1.bf16.msra.mxu0 0
      %508 = vmatprep.subr.bf16.mxu0 0
      %509 = vmatpush1.bf16.msra.mxu0 0
      %510 = vmatprep.subr.bf16.mxu0 0
      %511 = vmatpush1.bf16.msra.mxu0 0
      %512 = vmatprep.subr.bf16.mxu0 0
      %513 = vmatpush1.bf16.msra.mxu0 0
      %514 = vmatprep.subr.bf16.mxu0 0
      %515 = vmatpush1.bf16.msra.mxu0 0
      %516 = vmatprep.subr.bf16.mxu0 0
      %517 = vmatpush1.bf16.msra.mxu0 0
      %518 = vmatprep.mubr.bf16.mxu0 0
      %519 = vmatmul.mubr.bf16.gmra.mrb[0].mxu0 %v436
      %v520 = vpop.f32.mrb[0].mxu0
      %v521 = vadd.f32 %v426, %v520
      %v522 = vpop.f32.mrb[0].mxu0
      %v523 = vpop.f32.mrb[0].mxu0
      %v524 = vadd.f32 %v429, %v523
      %v525 = vpop.f32.mrb[0].mxu0
      %526 = vdwg.mxu0
      %v527 = vld [vmem:[#allocation2] sm:$0xe]
      %s528 = scalar_lea.vmem %s2, 128
      %v529 = vld [vmem:[%s528] sm:$0xf]
      %v530 = vld [vmem:[%s528 + $0x4] sm:$0xf]
      %v531 = vld [vmem:[%s528 + $0x8] sm:$0xf]
      %v532 = vld [vmem:[%s528 + $0xc] sm:$0xf]
      %v533 = vld [vmem:[%s528 + $0x10] sm:$0xf]
      %v534 = vld [vmem:[%s528 + $0x14] sm:$0xf]
      %v535 = vld [vmem:[%s528 + $0x18] sm:$0xf]
      %v536 = vld [vmem:[%s528 + $0x1c] sm:$0xf]
      %v537 = vld [vmem:[%s528 + $0x20] sm:$0xf]
      %v538 = vld [vmem:[%s528 + $0x24] sm:$0xf]
      %v539 = vld [vmem:[%s528 + $0x28] sm:$0xf]
      %v540 = vld [vmem:[%s528 + $0x2c] sm:$0xf]
      %v541 = vld [vmem:[%s528 + $0x30] sm:$0xf]
      %v542 = vld [vmem:[%s528 + $0x34] sm:$0xf]
      %v543 = vld [vmem:[%s528 + $0x38] sm:$0xf]
      %v544 = vld [vmem:[%s528 + $0x3c] sm:$0xf]
      %v546 = vunpack.c.l.b16 %v527
      %v547 = vpack.c.b16 %v325, %v546
      %vm548 = vcmask 1046528
      %v549 = vrot.slane %v547, 1
      %v550 = vrot.slane %v328, 1
      %v551 = vsel %vm548, %v549, %v550
      %v569 = vunpack.c.l.b16 %v529
      %v570 = vunpack.c.l.b16 %v530
      %v571 = vunpack.c.l.b16 %v531
      %v572 = vunpack.c.l.b16 %v532
      %v573 = vunpack.c.l.b16 %v533
      %v574 = vunpack.c.l.b16 %v534
      %v575 = vunpack.c.l.b16 %v535
      %v576 = vunpack.c.l.b16 %v536
      %v577 = vunpack.c.l.b16 %v537
      %v578 = vunpack.c.l.b16 %v538
      %v579 = vunpack.c.l.b16 %v539
      %v580 = vunpack.c.l.b16 %v540
      %v581 = vunpack.c.l.b16 %v541
      %v582 = vunpack.c.l.b16 %v542
      %v583 = vunpack.c.l.b16 %v543
      %v584 = vunpack.c.l.b16 %v544
      %v585 = vpack.c.b16 %v570, %v569
      %v586 = vpack.c.b16 %v572, %v571
      %v587 = vpack.c.b16 %v574, %v573
      %v588 = vpack.c.b16 %v576, %v575
      %v589 = vpack.c.b16 %v578, %v577
      %v590 = vpack.c.b16 %v580, %v579
      %v591 = vpack.c.b16 %v582, %v581
      %v592 = vpack.c.b16 %v584, %v583
      %601 = vmatprep.subr.bf16.mxu0 0
      %602 = vmatpush1.bf16.msra.mxu0 %v585
      %603 = vmatprep.subr.bf16.mxu0 0
      %604 = vmatpush1.bf16.msra.mxu0 %v586
      %605 = vmatprep.subr.bf16.mxu0 0
      %606 = vmatpush1.bf16.msra.mxu0 %v587
      %607 = vmatprep.subr.bf16.mxu0 0
      %608 = vmatpush1.bf16.msra.mxu0 %v588
      %609 = vmatprep.subr.bf16.mxu0 0
      %610 = vmatpush1.bf16.msra.mxu0 %v589
      %611 = vmatprep.subr.bf16.mxu0 0
      %612 = vmatpush1.bf16.msra.mxu0 %v590
      %613 = vmatprep.subr.bf16.mxu0 0
      %614 = vmatpush1.bf16.msra.mxu0 %v591
      %615 = vmatprep.subr.bf16.mxu0 0
      %616 = vmatpush1.bf16.msra.mxu0 %v592
      %617 = vmatprep.subr.bf16.mxu0 0
      %618 = vmatpush1.bf16.msra.mxu0 0
      %619 = vmatprep.subr.bf16.mxu0 0
      %620 = vmatpush1.bf16.msra.mxu0 0
      %621 = vmatprep.subr.bf16.mxu0 0
      %622 = vmatpush1.bf16.msra.mxu0 0
      %623 = vmatprep.subr.bf16.mxu0 0
      %624 = vmatpush1.bf16.msra.mxu0 0
      %625 = vmatprep.subr.bf16.mxu0 0
      %626 = vmatpush1.bf16.msra.mxu0 0
      %627 = vmatprep.subr.bf16.mxu0 0
      %628 = vmatpush1.bf16.msra.mxu0 0
      %629 = vmatprep.subr.bf16.mxu0 0
      %630 = vmatpush1.bf16.msra.mxu0 0
      %631 = vmatprep.subr.bf16.mxu0 0
      %632 = vmatpush1.bf16.msra.mxu0 0
      %633 = vmatprep.mubr.bf16.mxu0 0
      %634 = vmatmul.mubr.bf16.gmra.mrb[0].mxu0 %v551
      %v635 = vpop.f32.mrb[0].mxu0
      %v636 = vadd.f32 0.0, %v635
      %v637 = vpop.f32.mrb[0].mxu0
      %v638 = vpop.f32.mrb[0].mxu0
      %v639 = vadd.f32 0.0, %v638
      %v640 = vpop.f32.mrb[0].mxu0
      %641 = vdwg.mxu0
      %v642 = vadd.f32 %v521, %v636
      %v643 = vadd.f32 %v524, %v639
      %v644 = vld [vmem:[#allocation2 + $0x8] sm:$0x3]
      %s645 = scalar_lea.vmem %s2, 192
      %v646 = vld [vmem:[%s645] sm:$0xf]
      %v647 = vld [vmem:[%s645 + $0x4] sm:$0xf]
      %v648 = vld [vmem:[%s645 + $0x8] sm:$0xf]
      %v649 = vld [vmem:[%s645 + $0xc] sm:$0xf]
      %v650 = vld [vmem:[%s645 + $0x10] sm:$0xf]
      %v651 = vld [vmem:[%s645 + $0x14] sm:$0xf]
      %v652 = vld [vmem:[%s645 + $0x18] sm:$0xf]
      %v653 = vld [vmem:[%s645 + $0x1c] sm:$0xf]
      %v654 = vld [vmem:[%s645 + $0x20] sm:$0xf]
      %v655 = vld [vmem:[%s645 + $0x24] sm:$0xf]
      %v656 = vld [vmem:[%s645 + $0x28] sm:$0xf]
      %v657 = vld [vmem:[%s645 + $0x2c] sm:$0xf]
      %v658 = vld [vmem:[%s645 + $0x30] sm:$0xf]
      %v659 = vld [vmem:[%s645 + $0x34] sm:$0xf]
      %v660 = vld [vmem:[%s645 + $0x38] sm:$0xf]
      %v661 = vld [vmem:[%s645 + $0x3c] sm:$0xf]
      %v663 = vunpack.c.l.b16 %v644
      %v664 = vpack.c.b16 %v663, %v663
      %vm665 = vsmask.f32 6400
      %v667 = vshrl.u32 %v547, 16
      %v669 = vrot.slane %v667, 1
      %v670 = vshll.u32 %v547, 16
      %v672 = vrot.slane %v670, 2
      %v673 = vor.u32 %v669, %v672
      %v675 = vshrl.u32 %v664, 16
      %v677 = vrot.slane %v675, 1
      %v678 = vshll.u32 %v664, 16
      %v680 = vrot.slane %v678, 2
      %v681 = vor.u32 %v677, %v680
      %v682 = vsel %vm665, %v673, %v681
      %v700 = vunpack.c.l.b16 %v646
      %v701 = vunpack.c.l.b16 %v647
      %v702 = vunpack.c.l.b16 %v648
      %v703 = vunpack.c.l.b16 %v649
      %v704 = vunpack.c.l.b16 %v650
      %v705 = vunpack.c.l.b16 %v651
      %v706 = vunpack.c.l.b16 %v652
      %v707 = vunpack.c.l.b16 %v653
      %v708 = vunpack.c.l.b16 %v654
      %v709 = vunpack.c.l.b16 %v655
      %v710 = vunpack.c.l.b16 %v656
      %v711 = vunpack.c.l.b16 %v657
      %v712 = vunpack.c.l.b16 %v658
      %v713 = vunpack.c.l.b16 %v659
      %v714 = vunpack.c.l.b16 %v660
      %v715 = vunpack.c.l.b16 %v661
      %v716 = vpack.c.b16 %v701, %v700
      %v717 = vpack.c.b16 %v703, %v702
      %v718 = vpack.c.b16 %v705, %v704
      %v719 = vpack.c.b16 %v707, %v706
      %v720 = vpack.c.b16 %v709, %v708
      %v721 = vpack.c.b16 %v711, %v710
      %v722 = vpack.c.b16 %v713, %v712
      %v723 = vpack.c.b16 %v715, %v714
      %732 = vmatprep.subr.bf16.mxu0 0
      %733 = vmatpush1.bf16.msra.mxu0 %v716
      %734 = vmatprep.subr.bf16.mxu0 0
      %735 = vmatpush1.bf16.msra.mxu0 %v717
      %736 = vmatprep.subr.bf16.mxu0 0
      %737 = vmatpush1.bf16.msra.mxu0 %v718
      %738 = vmatprep.subr.bf16.mxu0 0
      %739 = vmatpush1.bf16.msra.mxu0 %v719
      %740 = vmatprep.subr.bf16.mxu0 0
      %741 = vmatpush1.bf16.msra.mxu0 %v720
      %742 = vmatprep.subr.bf16.mxu0 0
      %743 = vmatpush1.bf16.msra.mxu0 %v721
      %744 = vmatprep.subr.bf16.mxu0 0
      %745 = vmatpush1.bf16.msra.mxu0 %v722
      %746 = vmatprep.subr.bf16.mxu0 0
      %747 = vmatpush1.bf16.msra.mxu0 %v723
      %748 = vmatprep.subr.bf16.mxu0 0
      %749 = vmatpush1.bf16.msra.mxu0 0
      %750 = vmatprep.subr.bf16.mxu0 0
      %751 = vmatpush1.bf16.msra.mxu0 0
      %752 = vmatprep.subr.bf16.mxu0 0
      %753 = vmatpush1.bf16.msra.mxu0 0
      %754 = vmatprep.subr.bf16.mxu0 0
      %755 = vmatpush1.bf16.msra.mxu0 0
      %756 = vmatprep.subr.bf16.mxu0 0
      %757 = vmatpush1.bf16.msra.mxu0 0
      %758 = vmatprep.subr.bf16.mxu0 0
      %759 = vmatpush1.bf16.msra.mxu0 0
      %760 = vmatprep.subr.bf16.mxu0 0
      %761 = vmatpush1.bf16.msra.mxu0 0
      %762 = vmatprep.subr.bf16.mxu0 0
      %763 = vmatpush1.bf16.msra.mxu0 0
      %764 = vmatprep.mubr.bf16.mxu0 0
      %765 = vmatmul.mubr.bf16.gmra.mrb[0].mxu0 %v682
      %v766 = vpop.f32.mrb[0].mxu0
      %v767 = vadd.f32 0.0, %v766
      %v768 = vpop.f32.mrb[0].mxu0
      %v769 = vpop.f32.mrb[0].mxu0
      %v770 = vadd.f32 0.0, %v769
      %v771 = vpop.f32.mrb[0].mxu0
      %772 = vdwg.mxu0
      %v773 = vadd.f32 %v642, %v767
      %v774 = vadd.f32 %v643, %v770
      %v775 = vld [vmem:[#allocation2] sm:$0xc]
      %s776 = scalar_lea.vmem %s2, 256
      %v777 = vld [vmem:[%s776] sm:$0xf]
      %v778 = vld [vmem:[%s776 + $0x4] sm:$0xf]
      %v779 = vld [vmem:[%s776 + $0x8] sm:$0xf]
      %v780 = vld [vmem:[%s776 + $0xc] sm:$0xf]
      %v781 = vld [vmem:[%s776 + $0x10] sm:$0xf]
      %v782 = vld [vmem:[%s776 + $0x14] sm:$0xf]
      %v783 = vld [vmem:[%s776 + $0x18] sm:$0xf]
      %v784 = vld [vmem:[%s776 + $0x1c] sm:$0xf]
      %v785 = vld [vmem:[%s776 + $0x20] sm:$0xf]
      %v786 = vld [vmem:[%s776 + $0x24] sm:$0xf]
      %v787 = vld [vmem:[%s776 + $0x28] sm:$0xf]
      %v788 = vld [vmem:[%s776 + $0x2c] sm:$0xf]
      %v789 = vld [vmem:[%s776 + $0x30] sm:$0xf]
      %v790 = vld [vmem:[%s776 + $0x34] sm:$0xf]
      %v791 = vld [vmem:[%s776 + $0x38] sm:$0xf]
      %v792 = vld [vmem:[%s776 + $0x3c] sm:$0xf]
      %v794 = vunpack.c.l.b16 %v775
      %v795 = vpack.c.b16 %v325, %v794
      %vm796 = vcmask 1045504
      %v797 = vrot.slane %v795, 2
      %v798 = vrot.slane %v664, 2
      %v799 = vsel %vm796, %v797, %v798
      %v817 = vunpack.c.l.b16 %v777
      %v818 = vunpack.c.l.b16 %v778
      %v819 = vunpack.c.l.b16 %v779
      %v820 = vunpack.c.l.b16 %v780
      %v821 = vunpack.c.l.b16 %v781
      %v822 = vunpack.c.l.b16 %v782
      %v823 = vunpack.c.l.b16 %v783
      %v824 = vunpack.c.l.b16 %v784
      %v825 = vunpack.c.l.b16 %v785
      %v826 = vunpack.c.l.b16 %v786
      %v827 = vunpack.c.l.b16 %v787
      %v828 = vunpack.c.l.b16 %v788
      %v829 = vunpack.c.l.b16 %v789
      %v830 = vunpack.c.l.b16 %v790
      %v831 = vunpack.c.l.b16 %v791
      %v832 = vunpack.c.l.b16 %v792
      %v833 = vpack.c.b16 %v818, %v817
      %v834 = vpack.c.b16 %v820, %v819
      %v835 = vpack.c.b16 %v822, %v821
      %v836 = vpack.c.b16 %v824, %v823
      %v837 = vpack.c.b16 %v826, %v825
      %v838 = vpack.c.b16 %v828, %v827
      %v839 = vpack.c.b16 %v830, %v829
      %v840 = vpack.c.b16 %v832, %v831
      %849 = vmatprep.subr.bf16.mxu0 0
      %850 = vmatpush1.bf16.msra.mxu0 %v833
      %851 = vmatprep.subr.bf16.mxu0 0
      %852 = vmatpush1.bf16.msra.mxu0 %v834
      %853 = vmatprep.subr.bf16.mxu0 0
      %854 = vmatpush1.bf16.msra.mxu0 %v835
      %855 = vmatprep.subr.bf16.mxu0 0
      %856 = vmatpush1.bf16.msra.mxu0 %v836
      %857 = vmatprep.subr.bf16.mxu0 0
      %858 = vmatpush1.bf16.msra.mxu0 %v837
      %859 = vmatprep.subr.bf16.mxu0 0
      %860 = vmatpush1.bf16.msra.mxu0 %v838
      %861 = vmatprep.subr.bf16.mxu0 0
      %862 = vmatpush1.bf16.msra.mxu0 %v839
      %863 = vmatprep.subr.bf16.mxu0 0
      %864 = vmatpush1.bf16.msra.mxu0 %v840
      %865 = vmatprep.subr.bf16.mxu0 0
      %866 = vmatpush1.bf16.msra.mxu0 0
      %867 = vmatprep.subr.bf16.mxu0 0
      %868 = vmatpush1.bf16.msra.mxu0 0
      %869 = vmatprep.subr.bf16.mxu0 0
      %870 = vmatpush1.bf16.msra.mxu0 0
      %871 = vmatprep.subr.bf16.mxu0 0
      %872 = vmatpush1.bf16.msra.mxu0 0
      %873 = vmatprep.subr.bf16.mxu0 0
      %874 = vmatpush1.bf16.msra.mxu0 0
      %875 = vmatprep.subr.bf16.mxu0 0
      %876 = vmatpush1.bf16.msra.mxu0 0
      %877 = vmatprep.subr.bf16.mxu0 0
      %878 = vmatpush1.bf16.msra.mxu0 0
      %879 = vmatprep.subr.bf16.mxu0 0
      %880 = vmatpush1.bf16.msra.mxu0 0
      %881 = vmatprep.mubr.bf16.mxu0 0
      %882 = vmatmul.mubr.bf16.gmra.mrb[0].mxu0 %v799
      %v883 = vpop.f32.mrb[0].mxu0
      %v884 = vadd.f32 0.0, %v883
      %v885 = vpop.f32.mrb[0].mxu0
      %v886 = vpop.f32.mrb[0].mxu0
      %v887 = vadd.f32 0.0, %v886
      %v888 = vpop.f32.mrb[0].mxu0
      %889 = vdwg.mxu0
      %v890 = vadd.f32 %v773, %v884
      %v891 = vadd.f32 %v774, %v887
      %v892 = vld [vmem:[#allocation2 + $0x8] sm:$0x7]
      %s893 = scalar_lea.vmem %s2, 320
      %v894 = vld [vmem:[%s893] sm:$0xf]
      %v895 = vld [vmem:[%s893 + $0x4] sm:$0xf]
      %v896 = vld [vmem:[%s893 + $0x8] sm:$0xf]
      %v897 = vld [vmem:[%s893 + $0xc] sm:$0xf]
      %v898 = vld [vmem:[%s893 + $0x10] sm:$0xf]
      %v899 = vld [vmem:[%s893 + $0x14] sm:$0xf]
      %v900 = vld [vmem:[%s893 + $0x18] sm:$0xf]
      %v901 = vld [vmem:[%s893 + $0x1c] sm:$0xf]
      %v902 = vld [vmem:[%s893 + $0x20] sm:$0xf]
      %v903 = vld [vmem:[%s893 + $0x24] sm:$0xf]
      %v904 = vld [vmem:[%s893 + $0x28] sm:$0xf]
      %v905 = vld [vmem:[%s893 + $0x2c] sm:$0xf]
      %v906 = vld [vmem:[%s893 + $0x30] sm:$0xf]
      %v907 = vld [vmem:[%s893 + $0x34] sm:$0xf]
      %v908 = vld [vmem:[%s893 + $0x38] sm:$0xf]
      %v909 = vld [vmem:[%s893 + $0x3c] sm:$0xf]
      %v911 = vunpack.c.l.b16 %v892
      %v912 = vpack.c.b16 %v911, %v911
      %vm913 = vsmask.f32 5376
      %v915 = vshrl.u32 %v795, 16
      %v917 = vrot.slane %v915, 2
      %v918 = vshll.u32 %v795, 16
      %v920 = vrot.slane %v918, 3
      %v921 = vor.u32 %v917, %v920
      %v923 = vshrl.u32 %v912, 16
      %v925 = vrot.slane %v923, 2
      %v926 = vshll.u32 %v912, 16
      %v928 = vrot.slane %v926, 3
      %v929 = vor.u32 %v925, %v928
      %v930 = vsel %vm913, %v921, %v929
      %v948 = vunpack.c.l.b16 %v894
      %v949 = vunpack.c.l.b16 %v895
      %v950 = vunpack.c.l.b16 %v896
      %v951 = vunpack.c.l.b16 %v897
      %v952 = vunpack.c.l.b16 %v898
      %v953 = vunpack.c.l.b16 %v899
      %v954 = vunpack.c.l.b16 %v900
      %v955 = vunpack.c.l.b16 %v901
      %v956 = vunpack.c.l.b16 %v902
      %v957 = vunpack.c.l.b16 %v903
      %v958 = vunpack.c.l.b16 %v904
      %v959 = vunpack.c.l.b16 %v905
      %v960 = vunpack.c.l.b16 %v906
      %v961 = vunpack.c.l.b16 %v907
      %v962 = vunpack.c.l.b16 %v908
      %v963 = vunpack.c.l.b16 %v909
      %v964 = vpack.c.b16 %v949, %v948
      %v965 = vpack.c.b16 %v951, %v950
      %v966 = vpack.c.b16 %v953, %v952
      %v967 = vpack.c.b16 %v955, %v954
      %v968 = vpack.c.b16 %v957, %v956
      %v969 = vpack.c.b16 %v959, %v958
      %v970 = vpack.c.b16 %v961, %v960
      %v971 = vpack.c.b16 %v963, %v962
      %980 = vmatprep.subr.bf16.mxu0 0
      %981 = vmatpush1.bf16.msra.mxu0 %v964
      %982 = vmatprep.subr.bf16.mxu0 0
      %983 = vmatpush1.bf16.msra.mxu0 %v965
      %984 = vmatprep.subr.bf16.mxu0 0
      %985 = vmatpush1.bf16.msra.mxu0 %v966
      %986 = vmatprep.subr.bf16.mxu0 0
      %987 = vmatpush1.bf16.msra.mxu0 %v967
      %988 = vmatprep.subr.bf16.mxu0 0
      %989 = vmatpush1.bf16.msra.mxu0 %v968
      %990 = vmatprep.subr.bf16.mxu0 0
      %991 = vmatpush1.bf16.msra.mxu0 %v969
      %992 = vmatprep.subr.bf16.mxu0 0
      %993 = vmatpush1.bf16.msra.mxu0 %v970
      %994 = vmatprep.subr.bf16.mxu0 0
      %995 = vmatpush1.bf16.msra.mxu0 %v971
      %996 = vmatprep.subr.bf16.mxu0 0
      %997 = vmatpush1.bf16.msra.mxu0 0
      %998 = vmatprep.subr.bf16.mxu0 0
      %999 = vmatpush1.bf16.msra.mxu0 0
      %1000 = vmatprep.subr.bf16.mxu0 0
      %1001 = vmatpush1.bf16.msra.mxu0 0
      %1002 = vmatprep.subr.bf16.mxu0 0
      %1003 = vmatpush1.bf16.msra.mxu0 0
      %1004 = vmatprep.subr.bf16.mxu0 0
      %1005 = vmatpush1.bf16.msra.mxu0 0
      %1006 = vmatprep.subr.bf16.mxu0 0
      %1007 = vmatpush1.bf16.msra.mxu0 0
      %1008 = vmatprep.subr.bf16.mxu0 0
      %1009 = vmatpush1.bf16.msra.mxu0 0
      %1010 = vmatprep.subr.bf16.mxu0 0
      %1011 = vmatpush1.bf16.msra.mxu0 0
      %1012 = vmatprep.mubr.bf16.mxu0 0
      %1013 = vmatmul.mubr.bf16.gmra.mrb[0].mxu0 %v930
      %v1014 = vpop.f32.mrb[0].mxu0
      %v1015 = vadd.f32 0.0, %v1014
      %v1016 = vpop.f32.mrb[0].mxu0
      %v1017 = vpop.f32.mrb[0].mxu0
      %v1018 = vadd.f32 0.0, %v1017
      %v1019 = vpop.f32.mrb[0].mxu0
      %1020 = vdwg.mxu0
      %v1021 = vadd.f32 %v890, %v1015
      %v1022 = vadd.f32 %v891, %v1018
      %v1023 = vld [vmem:[#allocation2] sm:$0x8]
      %s1024 = scalar_lea.vmem %s2, 384
      %v1025 = vld [vmem:[%s1024] sm:$0xf]
      %v1026 = vld [vmem:[%s1024 + $0x4] sm:$0xf]
      %v1027 = vld [vmem:[%s1024 + $0x8] sm:$0xf]
      %v1028 = vld [vmem:[%s1024 + $0xc] sm:$0xf]
      %v1029 = vld [vmem:[%s1024 + $0x10] sm:$0xf]
      %v1030 = vld [vmem:[%s1024 + $0x14] sm:$0xf]
      %v1031 = vld [vmem:[%s1024 + $0x18] sm:$0xf]
      %v1032 = vld [vmem:[%s1024 + $0x1c] sm:$0xf]
      %v1033 = vld [vmem:[%s1024 + $0x20] sm:$0xf]
      %v1034 = vld [vmem:[%s1024 + $0x24] sm:$0xf]
      %v1035 = vld [vmem:[%s1024 + $0x28] sm:$0xf]
      %v1036 = vld [vmem:[%s1024 + $0x2c] sm:$0xf]
      %v1037 = vld [vmem:[%s1024 + $0x30] sm:$0xf]
      %v1038 = vld [vmem:[%s1024 + $0x34] sm:$0xf]
      %v1039 = vld [vmem:[%s1024 + $0x38] sm:$0xf]
      %v1040 = vld [vmem:[%s1024 + $0x3c] sm:$0xf]
      %v1042 = vunpack.c.l.b16 %v1023
      %v1043 = vpack.c.b16 %v325, %v1042
      %vm1044 = vcmask 1044480
      %v1045 = vrot.slane %v1043, 3
      %v1046 = vrot.slane %v912, 3
      %v1047 = vsel %vm1044, %v1045, %v1046
      %v1065 = vunpack.c.l.b16 %v1025
      %v1066 = vunpack.c.l.b16 %v1026
      %v1067 = vunpack.c.l.b16 %v1027
      %v1068 = vunpack.c.l.b16 %v1028
      %v1069 = vunpack.c.l.b16 %v1029
      %v1070 = vunpack.c.l.b16 %v1030
      %v1071 = vunpack.c.l.b16 %v1031
      %v1072 = vunpack.c.l.b16 %v1032
      %v1073 = vunpack.c.l.b16 %v1033
      %v1074 = vunpack.c.l.b16 %v1034
      %v1075 = vunpack.c.l.b16 %v1035
      %v1076 = vunpack.c.l.b16 %v1036
      %v1077 = vunpack.c.l.b16 %v1037
      %v1078 = vunpack.c.l.b16 %v1038
      %v1079 = vunpack.c.l.b16 %v1039
      %v1080 = vunpack.c.l.b16 %v1040
      %v1081 = vpack.c.b16 %v1066, %v1065
      %v1082 = vpack.c.b16 %v1068, %v1067
      %v1083 = vpack.c.b16 %v1070, %v1069
      %v1084 = vpack.c.b16 %v1072, %v1071
      %v1085 = vpack.c.b16 %v1074, %v1073
      %v1086 = vpack.c.b16 %v1076, %v1075
      %v1087 = vpack.c.b16 %v1078, %v1077
      %v1088 = vpack.c.b16 %v1080, %v1079
      %1097 = vmatprep.subr.bf16.mxu0 0
      %1098 = vmatpush1.bf16.msra.mxu0 %v1081
      %1099 = vmatprep.subr.bf16.mxu0 0
      %1100 = vmatpush1.bf16.msra.mxu0 %v1082
      %1101 = vmatprep.subr.bf16.mxu0 0
      %1102 = vmatpush1.bf16.msra.mxu0 %v1083
      %1103 = vmatprep.subr.bf16.mxu0 0
      %1104 = vmatpush1.bf16.msra.mxu0 %v1084
      %1105 = vmatprep.subr.bf16.mxu0 0
      %1106 = vmatpush1.bf16.msra.mxu0 %v1085
      %1107 = vmatprep.subr.bf16.mxu0 0
      %1108 = vmatpush1.bf16.msra.mxu0 %v1086
      %1109 = vmatprep.subr.bf16.mxu0 0
      %1110 = vmatpush1.bf16.msra.mxu0 %v1087
      %1111 = vmatprep.subr.bf16.mxu0 0
      %1112 = vmatpush1.bf16.msra.mxu0 %v1088
      %1113 = vmatprep.subr.bf16.mxu0 0
      %1114 = vmatpush1.bf16.msra.mxu0 0
      %1115 = vmatprep.subr.bf16.mxu0 0
      %1116 = vmatpush1.bf16.msra.mxu0 0
      %1117 = vmatprep.subr.bf16.mxu0 0
      %1118 = vmatpush1.bf16.msra.mxu0 0
      %1119 = vmatprep.subr.bf16.mxu0 0
      %1120 = vmatpush1.bf16.msra.mxu0 0
      %1121 = vmatprep.subr.bf16.mxu0 0
      %1122 = vmatpush1.bf16.msra.mxu0 0
      %1123 = vmatprep.subr.bf16.mxu0 0
      %1124 = vmatpush1.bf16.msra.mxu0 0
      %1125 = vmatprep.subr.bf16.mxu0 0
      %1126 = vmatpush1.bf16.msra.mxu0 0
      %1127 = vmatprep.subr.bf16.mxu0 0
      %1128 = vmatpush1.bf16.msra.mxu0 0
      %1129 = vmatprep.mubr.bf16.mxu0 0
      %1130 = vmatmul.mubr.bf16.gmra.mrb[0].mxu0 %v1047
      %v1131 = vpop.f32.mrb[0].mxu0
      %v1132 = vadd.f32 0.0, %v1131
      %v1133 = vpop.f32.mrb[0].mxu0
      %v1134 = vpop.f32.mrb[0].mxu0
      %v1135 = vadd.f32 0.0, %v1134
      %v1136 = vpop.f32.mrb[0].mxu0
      %1137 = vdwg.mxu0
      %v1138 = vadd.f32 %v1021, %v1132
      %v1139 = vadd.f32 %v1022, %v1135
      %v1140 = vpack.c.bf16 %v1139, %v1138
      %v1142 = vunpack.c.l.b16 %v1140
      %v1143 = vunpack.c.h.b16 %v1140
      %v1144 = vpack.c.b16 %v1142, %v1142
      %v1145 = vpack.c.b16 %v1143, %v1143
      %1148 = vst [vmem:[%s270] sm:$0xf] %v1144
      %1149 = vst [vmem:[%s270 + $0x4] sm:$0xf] %v1145
      %s1150 = smul.u32 %s21, 16
      %v1151 = vlaneseq
      %v1152 = vshrl.u32 %v1151, 7
      %v1153 = vadd.s32 %v1152, 8
      %v1154 = vstv %s1150
      %v1155 = vadd.s32 %v1154, %v1152
      %v1156 = vadd.s32 %v1154, %v1153
      %vm1157 = vcmp.lt.s32.totalorder %v1155, 16
      %vm1158 = vcmp.lt.s32.totalorder %v1156, 16
      %v1159 = vsel %vm1157, 1, 0
      %v1160 = vsel %vm1158, 1, 0
      %vm1161 = vcmp.eq.s32.totalorder %v1159, 1
      %vm1162 = vcmp.eq.s32.totalorder %v1160, 1
      %v1163 = vsel %vm1161, %v1138, 0.0
      %v1164 = vsel %vm1162, %v1139, 0.0
      %v1165 = vadd.f32 %v1163, %v1164
      %v1166 = vrot.slane %v1165, 4
      %v1167 = vadd.f32 %v1165, %v1166
      %v1168 = vrot.slane %v1167, 2
      %v1169 = vadd.f32 %v1167, %v1168
      %v1170 = vrot.slane %v1169, 1
      %v1171 = vadd.f32 %v1169, %v1170
      %v1172 = vmul.f32 %v1163, %v1163
      %v1173 = vmul.f32 %v1164, %v1164
      %v1174 = vadd.f32 %v1172, %v1173
      %v1175 = vrot.slane %v1174, 4
      %v1176 = vadd.f32 %v1174, %v1175
      %v1177 = vrot.slane %v1176, 2
      %v1178 = vadd.f32 %v1176, %v1177
      %v1179 = vrot.slane %v1178, 1
      %v1180 = vadd.f32 %v1178, %v1179
      %vm1181 = vcmask 1040384
      %v1182 = vsel %vm1181, %v1171, %v1180
      %p1183 = scmp.eq.s32.totalorder %s21, 0
      // Predicated region
      $region33: #{multi_scale_block.2} parent=31 // pred_check
        %p1184 = pneg %p1183
      $region34: #{multi_scale_block.2} parent=31 // pred_check_branch
        %1186 = sbr.rel (%p1184) target = $region36
      $region35: #{multi_scale_block.2} parent=31 // pred_region
        %1187 = vst [vmem:[%s275] sm:$0x3] %v1182
      $region36: #{multi_scale_block.2} parent=31 // pred_fallthru
        _
      %p1188 = scmp.gt.s32.totalorder %s21, 0
      // Predicated region
      $region37: #{multi_scale_block.2} parent=31 // pred_check
        %p1189 = pneg %p1188
      $region38: #{multi_scale_block.2} parent=31 // pred_check_branch
        %1191 = sbr.rel (%p1189) target = $region40
      $region39: #{multi_scale_block.2} parent=31 // pred_region
        %v1192 = vld [vmem:[%s275] sm:$0x3]
        %v1193 = vadd.f32 %v1192, %v1182
        %1194 = vst [vmem:[%s275] sm:$0x3] %v1193
      $region40: #{multi_scale_block.2} parent=31 // pred_fallthru
        _
      %s1195 = smul.u32 2, %s21
      %p1196 = scmp.lt.s32.totalorder %s20, 1
      %s1197 = scalar_select %p1196, %s20, 1
      %p1198 = scmp.lt.s32.totalorder %s1195, 1
      %s1199 = scalar_select %p1198, %s1195, 1
      %s1200 = smul.addr %s1197, 2
      %s1201 = sadd.s32 %s1199, %s1200
      %s1202 = smul.addr %s1201, 4
      %s1203 = scalar_lea.vmem %s3, %s1202
      %p1204 = scmp.lt.s32.totalorder %s20, 1
      %s1205 = scalar_select %p1204, %s20, 1
      %s1206 = smul.addr %s1205, 2
      %s1207 = scalar_lea.vmem %s4, %s1206
      // Predicated region
      $region41: #{multi_scale_block.2} parent=31 // pred_check
        %p1208 = pneg %p125
      $region42: #{multi_scale_block.2} parent=31 // pred_check_branch
        %1210 = sbr.rel (%p1208) target = $region44
      $region43: #{multi_scale_block.2} parent=31 // pred_region
        %s1211 = smul.u32 2, %s21
      $region44: #{multi_scale_block.2} parent=31 // pred_fallthru
        _
      // Predicated region
      $region45: #{multi_scale_block.2} parent=31 // pred_check
        %p1212 = pneg %p151
      $region46: #{multi_scale_block.2} parent=31 // pred_check_branch
        %1214 = sbr.rel (%p1212) target = $region48
      $region47: #{multi_scale_block.2} parent=31 // pred_region
        _
      $region48: #{multi_scale_block.2} parent=31 // pred_fallthru
        _
    $region32: #{multi_scale_block.2} parent=5 // pred_fallthru
      _
    %p1215 = scmp.le.s32.totalorder 2, %s11
    // Predicated region
    $region49: #{multi_scale_block.2} parent=5 // pred_check
      %p1216 = pneg %p1215
    $region50: #{multi_scale_block.2} parent=5 // pred_check_branch
      %1218 = sbr.rel (%p1216) target = $region52
    $region51: #{multi_scale_block.2} parent=5 // pred_region
      %s1219 = ssub.s32 %s11, 2
      // Predicated region
      $region53: #{multi_scale_block.2} parent=51 // pred_check
        %p1220 = pneg %p131
      $region54: #{multi_scale_block.2} parent=51 // pred_check_branch
        %1222 = sbr.rel (%p1220) target = $region56
      $region55: #{multi_scale_block.2} parent=51 // pred_region
        %s1223 = smul.u32 2, %s23
        %p1224 = scmp.lt.s32.totalorder %s22, 1
        %s1225 = scalar_select %p1224, %s22, 1
        %p1226 = scmp.lt.s32.totalorder %s1223, 1
        %s1227 = scalar_select %p1226, %s1223, 1
        %s1228 = smul.addr %s1225, 2
        %s1229 = sadd.s32 %s1227, %s1228
        %s1230 = smul.addr %s1229, 4
        %s1231 = scalar_lea.vmem %s3, %s1230
      $region56: #{multi_scale_block.2} parent=51 // pred_fallthru
        _
      // Predicated region
      $region57: #{multi_scale_block.2} parent=51 // pred_check
        %p1232 = pneg %p157
      $region58: #{multi_scale_block.2} parent=51 // pred_check_branch
        %1234 = sbr.rel (%p1232) target = $region60
      $region59: #{multi_scale_block.2} parent=51 // pred_region
        %p1235 = scmp.lt.s32.totalorder %s22, 1
        %s1236 = scalar_select %p1235, %s22, 1
        %s1237 = smul.addr %s1236, 2
        %s1238 = scalar_lea.vmem %s4, %s1237
      $region60: #{multi_scale_block.2} parent=51 // pred_fallthru
        _
    $region52: #{multi_scale_block.2} parent=5 // pred_fallthru
      _
  $region6: #{multi_scale_block.2} parent=0 // loop_footer
    %s15 = sadd.s32 1, %s11
  $region7: #{multi_scale_block.2} parent=0 // loop_footer_branch
    %10 = sbr.rel target = $region3
  $region8: #{multi_scale_block.2} parent=0 // loop_exit
    _

</llo_original>
